<compile_context>
chip_gen: v7x
topology: tpu7x:2x2x1
jax: 0.10.0
libtpu: 0.0.40
codegen_flags: <defaults>
</compile_context>

<pallas_src>
import math
from functools import partial

import jax
import jax.numpy as jnp
from jax.experimental import pallas as pl
from jax.experimental.pallas import tpu as pltpu

_LN_EPS = 1e-5     # nn.LayerNorm default eps
_MED_EPS = 1e-6    # epsilon in create_adaptive_high_freq_mask
_SQRT_2_OVER_PI = 0.7978845608028654


def _gelu(x):
    # tanh-approximate GELU: the transcendental runs on the otherwise idle EUP slot.
    return 0.5 * x * (1.0 + jnp.tanh(_SQRT_2_OVER_PI * (x + 0.044715 * x * x * x)))


def _pick_block_batch(B, C, max_lanes=512):
    """Pick how many batches to fold into the lane dim per grid step.

    Prefers lane-dense folds (Bt*C % 128 == 0), then keeping >= 2 grid steps so
    dimension_semantics=("parallel",) can still split the batch axis across the
    two v7x TensorCores, then as many lanes as allowed.
    """
    best_bt, best_key = 1, (False, False, 0)
    for bt in range(1, B + 1):
        lanes = bt * C
        if lanes > max_lanes:
            break
        if B % bt:
            continue
        key = (lanes % 128 == 0, (B // bt) >= 2, lanes)
        if key > best_key:
            best_bt, best_key = bt, key
    return best_bt


# -----------------------------------------------------------------------------
# Pass A: LayerNorm1 + rfft (merged real/imag DFT matmul) + per-(b,f) energy.
# Folded layout: rows = sequence N, lanes = (local batch, channel) = Bt*C.
# -----------------------------------------------------------------------------
def _make_pass_a_kernel(bt):
    def kernel(x_ref, g_ref, s_ref, ln1w_ref, ln1b_ref, fst_ref,
               xfft_ref, energy_ref):
        x = x_ref[0]                                                # (N, Bt*C) f32
        # LayerNorm over each C-lane group via a block-diagonal averaging matmul
        # (relayout-free group reduction; kept in f32 for parity with the reference).
        mu = jnp.dot(x, g_ref[...], preferred_element_type=jnp.float32)
        xc = x - mu
        var = jnp.dot(xc * xc, g_ref[...], preferred_element_type=jnp.float32)
        xn = xc * jax.lax.rsqrt(var + _LN_EPS) * ln1w_ref[...] + ln1b_ref[...]
        # merged rfft (norm='ortho'): one (2F, N) @ (N, Bt*C) MXU matmul.
        X = jnp.dot(fst_ref[...], xn.astype(fst_ref.dtype),
                    preferred_element_type=jnp.float32)             # (2Fp, Bt*C)
        xfft_ref[0] = X.astype(xfft_ref.dtype)
        # per-(f, local batch) spectral energy: sum over each C-lane group.
        p = X * X
        if bt == 1:
            e2 = jnp.sum(p, axis=-1, keepdims=True)                 # (2Fp, 1)
        else:
            e2 = jnp.dot(p, s_ref[...], preferred_element_type=jnp.float32)  # (2Fp, Bt)
        fp = e2.shape[0] // 2
        energy_ref[0] = e2[:fp] + e2[fp:]                           # |Xr|^2 + |Xi|^2
    return kernel


# -----------------------------------------------------------------------------
# Pass B: adaptive spectral weighting + merged irfft + LayerNorm2 + ICB + residual.
# -----------------------------------------------------------------------------
def _make_pass_b_kernel(bt, fuse_conv2):
    def kernel(thr_ref, xres_ref, xfft_ref, ne_ref, st_ref,
               cwr_ref, cwi_ref, chr_ref, chi_ref, ast_ref,
               g_ref, ln2w_ref, ln2b_ref,
               w1_ref, b1_ref, w2_ref, b2_ref, w3_ref, b3_ref,
               o_ref):
        X = xfft_ref[0].astype(jnp.float32)                          # (2Fp, Bt*C)
        fp = X.shape[0] // 2
        Xr, Xi = X[:fp], X[fp:]                                      # 8-aligned slices

        # adaptive high-frequency mask: compare against the SMEM scalar threshold,
        # then broadcast the per-(f, batch) bit over that batch's C lanes.
        thr = thr_ref[0]
        mask_fb = (ne_ref[0] > thr).astype(jnp.float32)              # (Fp, Bt)
        if bt == 1:
            mask = jnp.broadcast_to(mask_fb, Xr.shape)
        else:
            mask = jnp.dot(mask_fb, st_ref[...],
                           preferred_element_type=jnp.float32)       # (Fp, Bt*C)

        # complex weighting: X*w + (X*mask)*w_high  ==  X*(w + mask*w_high)
        wr_eff = cwr_ref[...] + mask * chr_ref[...]
        wi_eff = cwi_ref[...] + mask * chi_ref[...]
        Wr = Xr * wr_eff - Xi * wi_eff
        Wi = Xr * wi_eff + Xi * wr_eff

        # merged irfft (norm='ortho', n=N): one (N, 2F) @ (2F, Bt*C) MXU matmul.
        Wst = jnp.concatenate([Wr, Wi], axis=0).astype(ast_ref.dtype)
        x_asb = jnp.dot(ast_ref[...], Wst,
                        preferred_element_type=jnp.float32)          # (N, Bt*C)

        # LayerNorm2 (group statistics via the block-diagonal averaging matmul).
        mu = jnp.dot(x_asb, g_ref[...], preferred_element_type=jnp.float32)
        xc = x_asb - mu
        var = jnp.dot(xc * xc, g_ref[...], preferred_element_type=jnp.float32)
        y = xc * jax.lax.rsqrt(var + _LN_EPS) * ln2w_ref[...] + ln2b_ref[...]

        # +-1 sequence shifts for the k=3 conv (zero padded at the sequence edges).
        n = y.shape[0]
        zrow = jnp.zeros((1, y.shape[1]), y.dtype)
        y_prev = jnp.concatenate([zrow, y[:n - 1]], axis=0)          # y[n-1]
        y_next = jnp.concatenate([y[1:], zrow], axis=0)              # y[n+1]

        mm = w1_ref.dtype
        y_m, yp_m, yn_m = y.astype(mm), y_prev.astype(mm), y_next.astype(mm)

        # ICB: Conv1d(k=1), Conv1d(k=3,pad=1), Conv1d(k=1) as (block-diagonal) matmuls.
        x1 = jnp.dot(y_m, w1_ref[...], preferred_element_type=jnp.float32) + b1_ref[...]
        if fuse_conv2:
            # lane seams are multiples of Bt*C (128-aligned here) -> safe concat.
            taps = jnp.concatenate([yp_m, y_m, yn_m], axis=1)        # (N, 3*Bt*C)
            x2 = jnp.dot(taps, w2_ref[...],
                         preferred_element_type=jnp.float32) + b2_ref[...]
        else:
            x2 = (jnp.dot(yp_m, w2_ref[0], preferred_element_type=jnp.float32)
                  + jnp.dot(y_m, w2_ref[1], preferred_element_type=jnp.float32)
                  + jnp.dot(yn_m, w2_ref[2], preferred_element_type=jnp.float32)
                  + b2_ref[...])
        g1 = _gelu(x1)
        g2 = _gelu(x2)
        out = x1 * g2 + x2 * g1                                      # drop = 0 -> identity
        icb = jnp.dot(out.astype(w3_ref.dtype), w3_ref[...],
                      preferred_element_type=jnp.float32) + b3_ref[...]
        o_ref[0] = xres_ref[0] + icb                                 # drop_path = 0
    return kernel


@partial(jax.jit, static_argnames=("matmul_dtype", "block_batch"))
def tslanet_layer(x, params, *, matmul_dtype=jnp.bfloat16, block_batch=None):
    """Forward of TSLANet_layer (use_ASB=use_ICB=True, drop=drop_path=0).

    matmul_dtype=jnp.bfloat16 (default) feeds the MXU natively; pass jnp.float32 for
    closeness to the f32 PyTorch reference.
    """
    orig_dtype = x.dtype
    B, N, C = x.shape
    F = N // 2 + 1
    Fp = ((F + 7) // 8) * 8                      # pad so real/imag halves are 8-row aligned
    H = params["conv1_w"].shape[1]

    Bt = block_batch if block_batch is not None else _pick_block_batch(B, C)
    assert B % Bt == 0, "block_batch must divide the batch size"
    G = B // Bt
    BtC, BtH = Bt * C, Bt * H
    fuse_conv2 = (BtC % 128 == 0)

    f32 = jnp.float32
    xf = x.astype(f32)
    # fold Bt batches into the lane dim: (G, N, Bt*C), lane index = b_local*C + c
    x_fold = xf.reshape(G, Bt, N, C).transpose(0, 2, 1, 3).reshape(G, N, BtC)

    # ---- exact DFT matrices for rfft/irfft along N with norm='ortho' ---------------
    d = jnp.fft.rfft(jnp.eye(N, dtype=f32), axis=0, norm="ortho")    # (F, N) complex
    fr = jnp.zeros((Fp, N), f32).at[:F].set(jnp.real(d))
    fi = jnp.zeros((Fp, N), f32).at[:F].set(jnp.imag(d))
    fstack = jnp.concatenate([fr, fi], axis=0).astype(matmul_dtype)  # (2Fp, N)
    eye_f = jnp.eye(F, dtype=jnp.complex64)
    ar = jnp.fft.irfft(eye_f, n=N, axis=0, norm="ortho")             # (N, F)
    ai = jnp.fft.irfft(1j * eye_f, n=N, axis=0, norm="ortho")        # (N, F)
    arp = jnp.zeros((N, Fp), f32).at[:, :F].set(ar)
    aip = jnp.zeros((N, Fp), f32).at[:, :F].set(ai)
    astack = jnp.concatenate([arp, aip], axis=1).astype(matmul_dtype)  # (N, 2Fp)

    # ---- block-diagonal constants for the folded (batch-in-lanes) layout -----------
    eyeb = jnp.eye(Bt, dtype=f32)

    def blockdiag(w):                      # (cin, cout) -> (Bt*cin, Bt*cout)
        cin, cout = w.shape
        return (eyeb[:, None, :, None] * w[None, :, None, :]).reshape(Bt * cin, Bt * cout)

    gmat = blockdiag(jnp.full((C, C), 1.0 / C, f32))                 # group-mean (BtC, BtC)
    smat = (eyeb[:, None, :] * jnp.ones((1, C, 1), f32)).reshape(BtC, Bt)   # group-sum
    stmat = smat.T                                                   # group -> lane broadcast

    tile_c = lambda v: jnp.tile(v.astype(f32).reshape(-1), Bt).reshape(1, BtC)
    tile_h = lambda v: jnp.tile(v.astype(f32).reshape(-1), Bt).reshape(1, BtH)

    ln1w_t, ln1b_t = tile_c(params["ln1_w"]), tile_c(params["ln1_b"])
    ln2w_t, ln2b_t = tile_c(params["ln2_w"]), tile_c(params["ln2_b"])
    cwr_t, cwi_t = tile_c(params["cw"][:, 0]), tile_c(params["cw"][:, 1])
    chr_t, chi_t = tile_c(params["cwh"][:, 0]), tile_c(params["cwh"][:, 1])

    # conv weights (already stored transposed vs torch: conv1 (C,H), conv2 (3,C,H), conv3 (H,C)).
    # When Bt > 1 they become block-diagonal so the folded layout never needs a relayout;
    # the extra zero-block MACs only appear when C < 128, i.e. when MXU lanes would idle anyway.
    w1_bd = blockdiag(params["conv1_w"].astype(f32)).astype(matmul_dtype)   # (BtC, BtH)
    w3_bd = blockdiag(params["conv3_w"].astype(f32)).astype(matmul_dtype)   # (BtH, BtC)
    w2_taps = [blockdiag(params["conv2_w"][k].astype(f32)) for k in range(3)]
    if fuse_conv2:
        w2_arg = jnp.concatenate(w2_taps, axis=0).astype(matmul_dtype)      # (3*BtC, BtH)
        w2_spec = pl.BlockSpec((3 * BtC, BtH), lambda i: (0, 0))
    else:
        w2_arg = jnp.stack(w2_taps, axis=0).astype(matmul_dtype)            # (3, BtC, BtH)
        w2_spec = pl.BlockSpec((3, BtC, BtH), lambda i: (0, 0, 0))
    b1_t, b2_t = tile_h(params["conv1_b"]), tile_h(params["conv2_b"])
    b3_t = tile_c(params["conv3_b"])

    cparams = pltpu.CompilerParams(
        dimension_semantics=("parallel",),
        vmem_limit_bytes=48 * 1024 * 1024,
    )
    bat = lambda i: (i, 0, 0)
    c2 = lambda i: (0, 0)

    # --------------------------- pass A: LN1 + rfft ---------------------------------
    xfft, energy_blk = pl.pallas_call(
        _make_pass_a_kernel(Bt),
        grid=(G,),
        in_specs=[
            pl.BlockSpec((1, N, BtC), bat),        # x (folded)
            pl.BlockSpec((BtC, BtC), c2),          # group-mean matrix (resident)
            pl.BlockSpec((BtC, Bt), c2),           # group-sum matrix  (resident)
            pl.BlockSpec((1, BtC), c2),            # ln1 weight (tiled)
            pl.BlockSpec((1, BtC), c2),            # ln1 bias   (tiled)
            pl.BlockSpec((2 * Fp, N), c2),         # stacked DFT matrix (resident)
        ],
        out_specs=(
            pl.BlockSpec((1, 2 * Fp, BtC), bat),   # [Xr; Xi]
            pl.BlockSpec((1, Fp, Bt), bat),        # per-(f, b) energy
        ),
        out_shape=(
            jax.ShapeDtypeStruct((G, 2 * Fp, BtC), matmul_dtype),
            jax.ShapeDtypeStruct((G, Fp, Bt), jnp.float32),
        ),
        compiler_params=cparams,
    )(x_fold, gmat, smat, ln1w_t, ln1b_t, fstack)

    # ---- tiny global threshold (torch.median lower-median / torch.quantile linear) --
    energy = energy_blk.transpose(0, 2, 1).reshape(B, Fp)[:, :F]     # (B, F)
    med = jnp.sort(energy, axis=1)[:, (F - 1) // 2][:, None]
    ne = energy / (med + _MED_EPS)
    threshold = jnp.quantile(ne, params["threshold"].reshape(()).astype(f32))
    ne_fold = jnp.pad(ne, ((0, 0), (0, Fp - F))).reshape(G, Bt, Fp).transpose(0, 2, 1)
    thr_arr = threshold.reshape(1).astype(f32)                       # SMEM scalar

    # -------- pass B: spectral weighting + irfft + LN2 + ICB + residual --------------
    out_fold = pl.pallas_call(
        _make_pass_b_kernel(Bt, fuse_conv2),
        grid=(G,),
        in_specs=[
            pl.BlockSpec(memory_space=pltpu.MemorySpace.SMEM),   # threshold scalar
            pl.BlockSpec((1, N, BtC), bat),                      # residual x (folded)
            pl.BlockSpec((1, 2 * Fp, BtC), bat),                 # [Xr; Xi]
            pl.BlockSpec((1, Fp, Bt), bat),                      # normalized energy
            pl.BlockSpec((Bt, BtC), c2),                         # group -> lane broadcast
            pl.BlockSpec((1, BtC), c2),                          # complex_weight real (tiled)
            pl.BlockSpec((1, BtC), c2),                          # complex_weight imag
            pl.BlockSpec((1, BtC), c2),                          # complex_weight_high real
            pl.BlockSpec((1, BtC), c2),                          # complex_weight_high imag
            pl.BlockSpec((N, 2 * Fp), c2),                       # stacked iDFT matrix (resident)
            pl.BlockSpec((BtC, BtC), c2),                        # group-mean matrix
            pl.BlockSpec((1, BtC), c2),                          # ln2 weight
            pl.BlockSpec((1, BtC), c2),                          # ln2 bias
            pl.BlockSpec((BtC, BtH), c2),                        # conv1 weight (block-diag)
            pl.BlockSpec((1, BtH), c2),                          # conv1 bias
            w2_spec,                                             # conv2 weight(s)
            pl.BlockSpec((1, BtH), c2),                          # conv2 bias
            pl.BlockSpec((BtH, BtC), c2),                        # conv3 weight (block-diag)
            pl.BlockSpec((1, BtC), c2),                          # conv3 bias
        ],
        out_specs=pl.BlockSpec((1, N, BtC), bat),
        out_shape=jax.ShapeDtypeStruct((G, N, BtC), jnp.float32),
        compiler_params=cparams,
    )(thr_arr, x_fold, xfft, ne_fold, stmat,
      cwr_t, cwi_t, chr_t, chi_t, astack,
      gmat, ln2w_t, ln2b_t,
      w1_bd, b1_t, w2_arg, b2_t, w3_bd, b3_t)

    out = out_fold.reshape(G, N, Bt, C).transpose(0, 2, 1, 3).reshape(B, N, C)
    return out.astype(orig_dtype)


# -----------------------------------------------------------------------------
# pure-JAX reference (same parameter layout / same GELU approximation) for self-check
# -----------------------------------------------------------------------------
def _tslanet_layer_ref(x, params):
    B, N, C = x.shape
    xf = x.astype(jnp.float32)

    def ln(v, w, b):
        mu = jnp.mean(v, axis=-1, keepdims=True)
        var = jnp.mean((v - mu) ** 2, axis=-1, keepdims=True)
        return (v - mu) * jax.lax.rsqrt(var + _LN_EPS) * w + b

    xn = ln(xf, params["ln1_w"], params["ln1_b"])
    xfft = jnp.fft.rfft(xn, axis=1, norm="ortho")                    # (B, F, C)
    w = params["cw"][:, 0] + 1j * params["cw"][:, 1]
    xw = xfft * w
    energy = jnp.sum(jnp.abs(xfft) ** 2, axis=-1)                    # (B, F)
    Fn = energy.shape[1]
    med = jnp.sort(energy, axis=1)[:, (Fn - 1) // 2][:, None]
    ne = energy / (med + _MED_EPS)
    thr = jnp.quantile(ne, params["threshold"].reshape(()))
    mask = (ne > thr).astype(jnp.float32)[:, :, None]
    wh = params["cwh"][:, 0] + 1j * params["cwh"][:, 1]
    xw = xw + (xfft * mask) * wh
    x_asb = jnp.fft.irfft(xw, n=N, axis=1, norm="ortho")             # (B, N, C)

    y = ln(x_asb, params["ln2_w"], params["ln2_b"])
    yp = jnp.pad(y, ((0, 0), (1, 0), (0, 0)))[:, :N]
    ynx = jnp.pad(y, ((0, 0), (0, 1), (0, 0)))[:, 1:]
    w1, b1 = params["conv1_w"], params["conv1_b"]
    w2, b2 = params["conv2_w"], params["conv2_b"]
    w3, b3 = params["conv3_w"], params["conv3_b"]
    x1 = jnp.einsum("bnc,ch->bnh", y, w1) + b1
    x2 = (jnp.einsum("bnc,ch->bnh", yp, w2[0]) + jnp.einsum("bnc,ch->bnh", y, w2[1])
          + jnp.einsum("bnc,ch->bnh", ynx, w2[2]) + b2)
    g1, g2 = _gelu(x1), _gelu(x2)
    icb = jnp.einsum("bnh,hc->bnc", x1 * g2 + x2 * g1, w3) + b3
    return xf + icb


def _make_params(key, C, H):
    ks = jax.random.split(key, 13)
    return {
        # complex_weight / complex_weight_high: synthetic normal*0.02 (stand-in for trunc_normal_)
        "cw": 0.02 * jax.random.normal(ks[0], (C, 2), jnp.float32),
        "cwh": 0.02 * jax.random.normal(ks[1], (C, 2), jnp.float32),
        "threshold": 0.5 * jax.random.uniform(ks[2], (1,), jnp.float32),
        "ln1_w": 1.0 + 0.05 * jax.random.normal(ks[3], (C,), jnp.float32),
        "ln1_b": 0.05 * jax.random.normal(ks[4], (C,), jnp.float32),
        "ln2_w": 1.0 + 0.05 * jax.random.normal(ks[5], (C,), jnp.float32),
        "ln2_b": 0.05 * jax.random.normal(ks[6], (C,), jnp.float32),
        # conv weights stored transposed vs torch: (C,H), (3,C,H)=weight.permute(2,1,0), (H,C)
        "conv1_w": jax.random.normal(ks[7], (C, H), jnp.float32) / math.sqrt(C),
        "conv1_b": 0.01 * jax.random.normal(ks[8], (H,), jnp.float32),
        "conv2_w": jax.random.normal(ks[9], (3, C, H), jnp.float32) / math.sqrt(3 * C),
        "conv2_b": 0.01 * jax.random.normal(ks[10], (H,), jnp.float32),
        "conv3_w": jax.random.normal(ks[11], (H, C), jnp.float32) / math.sqrt(H),
        "conv3_b": 0.01 * jax.random.normal(ks[12], (C,), jnp.float32),
    }


if __name__ == "__main__":
    key = jax.random.PRNGKey(0)
    kp, kx1, kx2 = jax.random.split(key, 3)

    N, C = 8, 16
    H = int(C * 3.0)                      # mlp_hidden_dim = dim * mlp_ratio
    params = _make_params(kp, C, H)

    # primary run: bf16 MXU operands (default), B=2 -> Bt=1, 2 grid steps
    x = jax.random.normal(kx1, (2, N, C), jnp.float32)
    out = jax.block_until_ready(tslanet_layer(x, params))
    assert out.shape == (2, N, C)
    assert bool(jnp.all(jnp.isfinite(out)))

    # correctness self-checks vs the pure-JAX reference (f32 operands):
    #   B=4 -> Bt=2 (block-diag folded weights, 2 grid steps, un-fused conv2)
    #   B=8 -> Bt=8 (128-lane fold, fused conv2 tap matmul)
    for bsz in (4, 8):
        xb = jax.random.normal(jax.random.fold_in(kx2, bsz), (bsz, N, C), jnp.float32)
        got = jax.block_until_ready(tslanet_layer(xb, params, matmul_dtype=jnp.float32))
        want = _tslanet_layer_ref(xb, params)
        err = float(jnp.max(jnp.abs(got - want)))
        assert err < 5e-2, f"self-check failed at B={bsz}: max|err|={err}"

    print("KERNEL_OK")
</pallas_src>

<mosaic_0001>
module attributes {stable_mosaic.version = 11 : i64} {
  func.func @kernel(%arg0: i32, %arg1: memref<1x8x16xf32, #tpu.memory_space<vmem>>, %arg2: memref<16x16xf32, #tpu.memory_space<vmem>>, %arg3: memref<16x1xf32, #tpu.memory_space<vmem>>, %arg4: memref<1x16xf32, #tpu.memory_space<vmem>>, %arg5: memref<1x16xf32, #tpu.memory_space<vmem>>, %arg6: memref<16x8xbf16, #tpu.memory_space<vmem>>, %arg7: memref<1x16x16xbf16, #tpu.memory_space<vmem>>, %arg8: memref<1x8x1xf32, #tpu.memory_space<vmem>>) attributes {dimension_semantics = [#tpu.dimension_semantics<parallel>], iteration_bounds = array<i64: 2>, scalar_prefetch = 0 : i64, scratch_operands = 0 : i64, tpu.core_type = #tpu.core_type<tc>, window_params = [{transform_indices = @transform_0, window_bounds = array<i64: 1, 8, 16>}, {pipeline_mode = #tpu.pipeline_mode<synchronous>, transform_indices = @transform_1, window_bounds = array<i64: 16, 16>}, {pipeline_mode = #tpu.pipeline_mode<synchronous>, transform_indices = @transform_2, window_bounds = array<i64: 16, 1>}, {pipeline_mode = #tpu.pipeline_mode<synchronous>, transform_indices = @transform_3, window_bounds = array<i64: 1, 16>}, {pipeline_mode = #tpu.pipeline_mode<synchronous>, transform_indices = @transform_4, window_bounds = array<i64: 1, 16>}, {pipeline_mode = #tpu.pipeline_mode<synchronous>, transform_indices = @transform_5, window_bounds = array<i64: 16, 8>}, {transform_indices = @transform_6, window_bounds = array<i64: 1, 16, 16>}, {transform_indices = @transform_7, window_bounds = array<i64: 1, 8, 1>}]} {
    %c0 = arith.constant 0 : index
    %c0_0 = arith.constant 0 : index
    %c0_1 = arith.constant 0 : index
    %0 = vector.load %arg1[%c0, %c0_0, %c0_1] : memref<1x8x16xf32, #tpu.memory_space<vmem>>, vector<1x8x16xf32>
    %1 = vector.shape_cast %0 : vector<1x8x16xf32> to vector<8x16xf32>
    %c0_2 = arith.constant 0 : index
    %c0_3 = arith.constant 0 : index
    %2 = vector.load %arg2[%c0_2, %c0_3] : memref<16x16xf32, #tpu.memory_space<vmem>>, vector<16x16xf32>
    %cst = arith.constant dense<0.000000e+00> : vector<8x16xf32>
    %3 = tpu.matmul %1, %2, %cst {dimension_numbers = #tpu.dot_dimension_numbers<[1], [0], [0], [1], [0, 0, 1, 1], [], []>} : vector<8x16xf32>, vector<16x16xf32>, vector<8x16xf32> -> vector<8x16xf32>
    %4 = arith.subf %1, %3 : vector<8x16xf32>
    %5 = arith.mulf %4, %4 : vector<8x16xf32>
    %c0_4 = arith.constant 0 : index
    %c0_5 = arith.constant 0 : index
    %6 = vector.load %arg2[%c0_4, %c0_5] : memref<16x16xf32, #tpu.memory_space<vmem>>, vector<16x16xf32>
    %cst_6 = arith.constant dense<0.000000e+00> : vector<8x16xf32>
    %7 = tpu.matmul %5, %6, %cst_6 {dimension_numbers = #tpu.dot_dimension_numbers<[1], [0], [0], [1], [0, 0, 1, 1], [], []>} : vector<8x16xf32>, vector<16x16xf32>, vector<8x16xf32> -> vector<8x16xf32>
    %cst_7 = arith.constant 9.99999974E-6 : f32
    %8 = vector.broadcast %cst_7 : f32 to vector<8x16xf32>
    %9 = arith.addf %7, %8 : vector<8x16xf32>
    %10 = math.rsqrt %9 : vector<8x16xf32>
    %11 = arith.mulf %4, %10 : vector<8x16xf32>
    %c0_8 = arith.constant 0 : index
    %c0_9 = arith.constant 0 : index
    %12 = vector.load %arg4[%c0_8, %c0_9] : memref<1x16xf32, #tpu.memory_space<vmem>>, vector<1x16xf32>
    %13 = vector.broadcast %12 : vector<1x16xf32> to vector<8x16xf32>
    %14 = arith.mulf %11, %13 : vector<8x16xf32>
    %c0_10 = arith.constant 0 : index
    %c0_11 = arith.constant 0 : index
    %15 = vector.load %arg5[%c0_10, %c0_11] : memref<1x16xf32, #tpu.memory_space<vmem>>, vector<1x16xf32>
    %16 = vector.broadcast %15 : vector<1x16xf32> to vector<8x16xf32>
    %17 = arith.addf %14, %16 : vector<8x16xf32>
    %c0_12 = arith.constant 0 : index
    %c0_13 = arith.constant 0 : index
    %18 = vector.load %arg6[%c0_12, %c0_13] : memref<16x8xbf16, #tpu.memory_space<vmem>>, vector<16x8xbf16>
    %19 = arith.truncf %17 : vector<8x16xf32> to vector<8x16xbf16>
    %cst_14 = arith.constant dense<0.000000e+00> : vector<16x16xf32>
    %20 = tpu.matmul %18, %19, %cst_14 {dimension_numbers = #tpu.dot_dimension_numbers<[1], [0], [0], [1], [0, 0, 1, 1], [], []>} : vector<16x8xbf16>, vector<8x16xbf16>, vector<16x16xf32> -> vector<16x16xf32>
    %21 = arith.truncf %20 : vector<16x16xf32> to vector<16x16xbf16>
    %c0_15 = arith.constant 0 : index
    %c0_16 = arith.constant 0 : index
    %c0_17 = arith.constant 0 : index
    %22 = vector.load %arg7[%c0_15, %c0_16, %c0_17] : memref<1x16x16xbf16, #tpu.memory_space<vmem>>, vector<1x16x16xbf16>
    %23 = vector.shape_cast %22 : vector<1x16x16xbf16> to vector<16x16xbf16>
    %24 = vector.shape_cast %21 : vector<16x16xbf16> to vector<1x16x16xbf16>
    tpu.vector_store %arg7[%c0_15, %c0_16, %c0_17], %24 {strides = array<i32>} : memref<1x16x16xbf16, #tpu.memory_space<vmem>>, vector<1x16x16xbf16>,
    %25 = arith.mulf %20, %20 : vector<16x16xf32>
    %cst_18 = arith.constant dense<0.000000e+00> : vector<16xf32>
    %26 = vector.multi_reduction <add>, %25, %cst_18 [1] : vector<16x16xf32> to vector<16xf32>
    %27 = vector.shape_cast %26 : vector<16xf32> to vector<16x1xf32>
    %28 = vector.extract_strided_slice %27 {offsets = [0, 0], sizes = [8, 1], strides = [1, 1]} : vector<16x1xf32> to vector<8x1xf32>
    %29 = vector.extract_strided_slice %27 {offsets = [8, 0], sizes = [8, 1], strides = [1, 1]} : vector<16x1xf32> to vector<8x1xf32>
    %30 = arith.addf %28, %29 : vector<8x1xf32>
    %c0_19 = arith.constant 0 : index
    %c0_20 = arith.constant 0 : index
    %c0_21 = arith.constant 0 : index
    %31 = vector.load %arg8[%c0_19, %c0_20, %c0_21] : memref<1x8x1xf32, #tpu.memory_space<vmem>>, vector<1x8x1xf32>
    %32 = vector.shape_cast %31 : vector<1x8x1xf32> to vector<8x1xf32>
    %33 = vector.shape_cast %30 : vector<8x1xf32> to vector<1x8x1xf32>
    tpu.vector_store %arg8[%c0_19, %c0_20, %c0_21], %33 {strides = array<i32>} : memref<1x8x1xf32, #tpu.memory_space<vmem>>, vector<1x8x1xf32>,
    return
  }
  func.func @transform_0(%arg0: i32) -> (i32, i32, i32) {
    %c0_i32 = arith.constant 0 : i32
    %c0_i32_0 = arith.constant 0 : i32
    %c0_i32_1 = arith.constant 0 : i32
    return %arg0, %c0_i32, %c0_i32_0 : i32, i32, i32
  }
  func.func @transform_1(%arg0: i32) -> (i32, i32) {
    %c0_i32 = arith.constant 0 : i32
    %c0_i32_0 = arith.constant 0 : i32
    %c0_i32_1 = arith.constant 0 : i32
    return %c0_i32, %c0_i32_0 : i32, i32
  }
  func.func @transform_2(%arg0: i32) -> (i32, i32) {
    %c0_i32 = arith.constant 0 : i32
    %c0_i32_0 = arith.constant 0 : i32
    %c0_i32_1 = arith.constant 0 : i32
    return %c0_i32, %c0_i32_0 : i32, i32
  }
  func.func @transform_3(%arg0: i32) -> (i32, i32) {
    %c0_i32 = arith.constant 0 : i32
    %c0_i32_0 = arith.constant 0 : i32
    %c0_i32_1 = arith.constant 0 : i32
    return %c0_i32, %c0_i32_0 : i32, i32
  }
  func.func @transform_4(%arg0: i32) -> (i32, i32) {
    %c0_i32 = arith.constant 0 : i32
    %c0_i32_0 = arith.constant 0 : i32
    %c0_i32_1 = arith.constant 0 : i32
    return %c0_i32, %c0_i32_0 : i32, i32
  }
  func.func @transform_5(%arg0: i32) -> (i32, i32) {
    %c0_i32 = arith.constant 0 : i32
    %c0_i32_0 = arith.constant 0 : i32
    %c0_i32_1 = arith.constant 0 : i32
    return %c0_i32, %c0_i32_0 : i32, i32
  }
  func.func @transform_6(%arg0: i32) -> (i32, i32, i32) {
    %c0_i32 = arith.constant 0 : i32
    %c0_i32_0 = arith.constant 0 : i32
    %c0_i32_1 = arith.constant 0 : i32
    return %arg0, %c0_i32, %c0_i32_0 : i32, i32, i32
  }
  func.func @transform_7(%arg0: i32) -> (i32, i32, i32) {
    %c0_i32 = arith.constant 0 : i32
    %c0_i32_0 = arith.constant 0 : i32
    %c0_i32_1 = arith.constant 0 : i32
    return %arg0, %c0_i32, %c0_i32_0 : i32, i32, i32
  }
}

module attributes {stable_mosaic.version = 11 : i64} {
  func.func @kernel(%arg0: i32, %arg1: memref<1xf32, #tpu.memory_space<smem>>, %arg2: memref<1x8x16xf32, #tpu.memory_space<vmem>>, %arg3: memref<1x16x16xbf16, #tpu.memory_space<vmem>>, %arg4: memref<1x8x1xf32, #tpu.memory_space<vmem>>, %arg5: memref<1x16xf32, #tpu.memory_space<vmem>>, %arg6: memref<1x16xf32, #tpu.memory_space<vmem>>, %arg7: memref<1x16xf32, #tpu.memory_space<vmem>>, %arg8: memref<1x16xf32, #tpu.memory_space<vmem>>, %arg9: memref<1x16xf32, #tpu.memory_space<vmem>>, %arg10: memref<8x16xbf16, #tpu.memory_space<vmem>>, %arg11: memref<16x16xf32, #tpu.memory_space<vmem>>, %arg12: memref<1x16xf32, #tpu.memory_space<vmem>>, %arg13: memref<1x16xf32, #tpu.memory_space<vmem>>, %arg14: memref<16x48xbf16, #tpu.memory_space<vmem>>, %arg15: memref<1x48xf32, #tpu.memory_space<vmem>>, %arg16: memref<3x16x48xbf16, #tpu.memory_space<vmem>>, %arg17: memref<1x48xf32, #tpu.memory_space<vmem>>, %arg18: memref<48x16xbf16, #tpu.memory_space<vmem>>, %arg19: memref<1x16xf32, #tpu.memory_space<vmem>>, %arg20: memref<1x8x16xf32, #tpu.memory_space<vmem>>) attributes {dimension_semantics = [#tpu.dimension_semantics<parallel>], iteration_bounds = array<i64: 2>, scalar_prefetch = 0 : i64, scratch_operands = 0 : i64, tpu.core_type = #tpu.core_type<tc>, window_params = [{transform_indices = @transform_0, window_bounds = array<i64: 1>}, {transform_indices = @transform_1, window_bounds = array<i64: 1, 8, 16>}, {transform_indices = @transform_2, window_bounds = array<i64: 1, 16, 16>}, {transform_indices = @transform_3, window_bounds = array<i64: 1, 8, 1>}, {pipeline_mode = #tpu.pipeline_mode<synchronous>, transform_indices = @transform_4, window_bounds = array<i64: 1, 16>}, {pipeline_mode = #tpu.pipeline_mode<synchronous>, transform_indices = @transform_5, window_bounds = array<i64: 1, 16>}, {pipeline_mode = #tpu.pipeline_mode<synchronous>, transform_indices = @transform_6, window_bounds = array<i64: 1, 16>}, {pipeline_mode = #tpu.pipeline_mode<synchronous>, transform_indices = @transform_7, window_bounds = array<i64: 1, 16>}, {pipeline_mode = #tpu.pipeline_mode<synchronous>, transform_indices = @transform_8, window_bounds = array<i64: 1, 16>}, {pipeline_mode = #tpu.pipeline_mode<synchronous>, transform_indices = @transform_9, window_bounds = array<i64: 8, 16>}, {pipeline_mode = #tpu.pipeline_mode<synchronous>, transform_indices = @transform_10, window_bounds = array<i64: 16, 16>}, {pipeline_mode = #tpu.pipeline_mode<synchronous>, transform_indices = @transform_11, window_bounds = array<i64: 1, 16>}, {pipeline_mode = #tpu.pipeline_mode<synchronous>, transform_indices = @transform_12, window_bounds = array<i64: 1, 16>}, {pipeline_mode = #tpu.pipeline_mode<synchronous>, transform_indices = @transform_13, window_bounds = array<i64: 16, 48>}, {pipeline_mode = #tpu.pipeline_mode<synchronous>, transform_indices = @transform_14, window_bounds = array<i64: 1, 48>}, {pipeline_mode = #tpu.pipeline_mode<synchronous>, transform_indices = @transform_15, window_bounds = array<i64: 3, 16, 48>}, {pipeline_mode = #tpu.pipeline_mode<synchronous>, transform_indices = @transform_16, window_bounds = array<i64: 1, 48>}, {pipeline_mode = #tpu.pipeline_mode<synchronous>, transform_indices = @transform_17, window_bounds = array<i64: 48, 16>}, {pipeline_mode = #tpu.pipeline_mode<synchronous>, transform_indices = @transform_18, window_bounds = array<i64: 1, 16>}, {transform_indices = @transform_19, window_bounds = array<i64: 1, 8, 16>}]} {
    %c0 = arith.constant 0 : index
    %c0_0 = arith.constant 0 : index
    %c0_1 = arith.constant 0 : index
    %0 = vector.load %arg3[%c0, %c0_0, %c0_1] : memref<1x16x16xbf16, #tpu.memory_space<vmem>>, vector<1x16x16xbf16>
    %1 = vector.shape_cast %0 : vector<1x16x16xbf16> to vector<16x16xbf16>
    %2 = arith.extf %1 : vector<16x16xbf16> to vector<16x16xf32>
    %3 = vector.extract_strided_slice %2 {offsets = [0, 0], sizes = [8, 16], strides = [1, 1]} : vector<16x16xf32> to vector<8x16xf32>
    %4 = vector.extract_strided_slice %2 {offsets = [8, 0], sizes = [8, 16], strides = [1, 1]} : vector<16x16xf32> to vector<8x16xf32>
    %c0_2 = arith.constant 0 : index
    %5 = memref.load %arg1[%c0_2] : memref<1xf32, #tpu.memory_space<smem>>
    %c0_3 = arith.constant 0 : index
    %c0_4 = arith.constant 0 : index
    %c0_5 = arith.constant 0 : index
    %6 = vector.load %arg4[%c0_3, %c0_4, %c0_5] : memref<1x8x1xf32, #tpu.memory_space<vmem>>, vector<1x8x1xf32>
    %7 = vector.shape_cast %6 : vector<1x8x1xf32> to vector<8x1xf32>
    %8 = vector.broadcast %5 : f32 to vector<8x1xf32>
    %9 = arith.cmpf ogt, %7, %8 : vector<8x1xf32>
    %10 = arith.extui %9 : vector<8x1xi1> to vector<8x1xi32>
    %11 = arith.sitofp %10 : vector<8x1xi32> to vector<8x1xf32>
    %12 = vector.shape_cast %11 : vector<8x1xf32> to vector<8x1xf32>
    %13 = vector.broadcast %12 : vector<8x1xf32> to vector<8x16xf32>
    %c0_6 = arith.constant 0 : index
    %c0_7 = arith.constant 0 : index
    %14 = vector.load %arg6[%c0_6, %c0_7] : memref<1x16xf32, #tpu.memory_space<vmem>>, vector<1x16xf32>
    %c0_8 = arith.constant 0 : index
    %c0_9 = arith.constant 0 : index
    %15 = vector.load %arg8[%c0_8, %c0_9] : memref<1x16xf32, #tpu.memory_space<vmem>>, vector<1x16xf32>
    %16 = vector.broadcast %15 : vector<1x16xf32> to vector<8x16xf32>
    %17 = arith.mulf %13, %16 : vector<8x16xf32>
    %18 = vector.broadcast %14 : vector<1x16xf32> to vector<8x16xf32>
    %19 = arith.addf %18, %17 : vector<8x16xf32>
    %c0_10 = arith.constant 0 : index
    %c0_11 = arith.constant 0 : index
    %20 = vector.load %arg7[%c0_10, %c0_11] : memref<1x16xf32, #tpu.memory_space<vmem>>, vector<1x16xf32>
    %c0_12 = arith.constant 0 : index
    %c0_13 = arith.constant 0 : index
    %21 = vector.load %arg9[%c0_12, %c0_13] : memref<1x16xf32, #tpu.memory_space<vmem>>, vector<1x16xf32>
    %22 = vector.broadcast %21 : vector<1x16xf32> to vector<8x16xf32>
    %23 = arith.mulf %13, %22 : vector<8x16xf32>
    %24 = vector.broadcast %20 : vector<1x16xf32> to vector<8x16xf32>
    %25 = arith.addf %24, %23 : vector<8x16xf32>
    %26 = arith.mulf %3, %19 : vector<8x16xf32>
    %27 = arith.mulf %4, %25 : vector<8x16xf32>
    %28 = arith.subf %26, %27 : vector<8x16xf32>
    %29 = arith.mulf %3, %25 : vector<8x16xf32>
    %30 = arith.mulf %4, %19 : vector<8x16xf32>
    %31 = arith.addf %29, %30 : vector<8x16xf32>
    %32 = tpu.concatenate %28, %31 in 0 : vector<8x16xf32>, vector<8x16xf32> -> vector<16x16xf32>
    %33 = arith.truncf %32 : vector<16x16xf32> to vector<16x16xbf16>
    %c0_14 = arith.constant 0 : index
    %c0_15 = arith.constant 0 : index
    %34 = vector.load %arg10[%c0_14, %c0_15] : memref<8x16xbf16, #tpu.memory_space<vmem>>, vector<8x16xbf16>
    %cst = arith.constant dense<0.000000e+00> : vector<8x16xf32>
    %35 = tpu.matmul %34, %33, %cst {dimension_numbers = #tpu.dot_dimension_numbers<[1], [0], [0], [1], [0, 0, 1, 1], [], []>} : vector<8x16xbf16>, vector<16x16xbf16>, vector<8x16xf32> -> vector<8x16xf32>
    %c0_16 = arith.constant 0 : index
    %c0_17 = arith.constant 0 : index
    %36 = vector.load %arg11[%c0_16, %c0_17] : memref<16x16xf32, #tpu.memory_space<vmem>>, vector<16x16xf32>
    %cst_18 = arith.constant dense<0.000000e+00> : vector<8x16xf32>
    %37 = tpu.matmul %35, %36, %cst_18 {dimension_numbers = #tpu.dot_dimension_numbers<[1], [0], [0], [1], [0, 0, 1, 1], [], []>} : vector<8x16xf32>, vector<16x16xf32>, vector<8x16xf32> -> vector<8x16xf32>
    %38 = arith.subf %35, %37 : vector<8x16xf32>
    %39 = arith.mulf %38, %38 : vector<8x16xf32>
    %c0_19 = arith.constant 0 : index
    %c0_20 = arith.constant 0 : index
    %40 = vector.load %arg11[%c0_19, %c0_20] : memref<16x16xf32, #tpu.memory_space<vmem>>, vector<16x16xf32>
    %cst_21 = arith.constant dense<0.000000e+00> : vector<8x16xf32>
    %41 = tpu.matmul %39, %40, %cst_21 {dimension_numbers = #tpu.dot_dimension_numbers<[1], [0], [0], [1], [0, 0, 1, 1], [], []>} : vector<8x16xf32>, vector<16x16xf32>, vector<8x16xf32> -> vector<8x16xf32>
    %cst_22 = arith.constant 9.99999974E-6 : f32
    %42 = vector.broadcast %cst_22 : f32 to vector<8x16xf32>
    %43 = arith.addf %41, %42 : vector<8x16xf32>
    %44 = math.rsqrt %43 : vector<8x16xf32>
    %45 = arith.mulf %38, %44 : vector<8x16xf32>
    %c0_23 = arith.constant 0 : index
    %c0_24 = arith.constant 0 : index
    %46 = vector.load %arg12[%c0_23, %c0_24] : memref<1x16xf32, #tpu.memory_space<vmem>>, vector<1x16xf32>
    %47 = vector.broadcast %46 : vector<1x16xf32> to vector<8x16xf32>
    %48 = arith.mulf %45, %47 : vector<8x16xf32>
    %c0_25 = arith.constant 0 : index
    %c0_26 = arith.constant 0 : index
    %49 = vector.load %arg13[%c0_25, %c0_26] : memref<1x16xf32, #tpu.memory_space<vmem>>, vector<1x16xf32>
    %50 = vector.broadcast %49 : vector<1x16xf32> to vector<8x16xf32>
    %51 = arith.addf %48, %50 : vector<8x16xf32>
    %cst_27 = arith.constant 0.000000e+00 : f32
    %52 = vector.broadcast %cst_27 : f32 to vector<1x16xf32>
    %53 = vector.extract_strided_slice %51 {offsets = [0, 0], sizes = [7, 16], strides = [1, 1]} : vector<8x16xf32> to vector<7x16xf32>
    %54 = tpu.concatenate %52, %53 in 0 : vector<1x16xf32>, vector<7x16xf32> -> vector<8x16xf32>
    %55 = vector.extract_strided_slice %51 {offsets = [1, 0], sizes = [7, 16], strides = [1, 1]} : vector<8x16xf32> to vector<7x16xf32>
    %56 = tpu.concatenate %55, %52 in 0 : vector<7x16xf32>, vector<1x16xf32> -> vector<8x16xf32>
    %57 = arith.truncf %51 : vector<8x16xf32> to vector<8x16xbf16>
    %58 = arith.truncf %54 : vector<8x16xf32> to vector<8x16xbf16>
    %59 = arith.truncf %56 : vector<8x16xf32> to vector<8x16xbf16>
    %c0_28 = arith.constant 0 : index
    %c0_29 = arith.constant 0 : index
    %60 = vector.load %arg14[%c0_28, %c0_29] : memref<16x48xbf16, #tpu.memory_space<vmem>>, vector<16x48xbf16>
    %cst_30 = arith.constant dense<0.000000e+00> : vector<8x48xf32>
    %61 = tpu.matmul %57, %60, %cst_30 {dimension_numbers = #tpu.dot_dimension_numbers<[1], [0], [0], [1], [0, 0, 1, 1], [], []>} : vector<8x16xbf16>, vector<16x48xbf16>, vector<8x48xf32> -> vector<8x48xf32>
    %c0_31 = arith.constant 0 : index
    %c0_32 = arith.constant 0 : index
    %62 = vector.load %arg15[%c0_31, %c0_32] : memref<1x48xf32, #tpu.memory_space<vmem>>, vector<1x48xf32>
    %63 = vector.broadcast %62 : vector<1x48xf32> to vector<8x48xf32>
    %64 = arith.addf %61, %63 : vector<8x48xf32>
    %c0_33 = arith.constant 0 : index
    %c0_34 = arith.constant 0 : index
    %c0_35 = arith.constant 0 : index
    %65 = vector.load %arg16[%c0_33, %c0_34, %c0_35] : memref<3x16x48xbf16, #tpu.memory_space<vmem>>, vector<1x16x48xbf16>
    %66 = vector.shape_cast %65 : vector<1x16x48xbf16> to vector<16x48xbf16>
    %cst_36 = arith.constant dense<0.000000e+00> : vector<8x48xf32>
    %67 = tpu.matmul %58, %66, %cst_36 {dimension_numbers = #tpu.dot_dimension_numbers<[1], [0], [0], [1], [0, 0, 1, 1], [], []>} : vector<8x16xbf16>, vector<16x48xbf16>, vector<8x48xf32> -> vector<8x48xf32>
    %c1 = arith.constant 1 : index
    %c0_37 = arith.constant 0 : index
    %c0_38 = arith.constant 0 : index
    %68 = vector.load %arg16[%c1, %c0_37, %c0_38] : memref<3x16x48xbf16, #tpu.memory_space<vmem>>, vector<1x16x48xbf16>
    %69 = vector.shape_cast %68 : vector<1x16x48xbf16> to vector<16x48xbf16>
    %cst_39 = arith.constant dense<0.000000e+00> : vector<8x48xf32>
    %70 = tpu.matmul %57, %69, %cst_39 {dimension_numbers = #tpu.dot_dimension_numbers<[1], [0], [0], [1], [0, 0, 1, 1], [], []>} : vector<8x16xbf16>, vector<16x48xbf16>, vector<8x48xf32> -> vector<8x48xf32>
    %71 = arith.addf %67, %70 : vector<8x48xf32>
    %c2 = arith.constant 2 : index
    %c0_40 = arith.constant 0 : index
    %c0_41 = arith.constant 0 : index
    %72 = vector.load %arg16[%c2, %c0_40, %c0_41] : memref<3x16x48xbf16, #tpu.memory_space<vmem>>, vector<1x16x48xbf16>
    %73 = vector.shape_cast %72 : vector<1x16x48xbf16> to vector<16x48xbf16>
    %cst_42 = arith.constant dense<0.000000e+00> : vector<8x48xf32>
    %74 = tpu.matmul %59, %73, %cst_42 {dimension_numbers = #tpu.dot_dimension_numbers<[1], [0], [0], [1], [0, 0, 1, 1], [], []>} : vector<8x16xbf16>, vector<16x48xbf16>, vector<8x48xf32> -> vector<8x48xf32>
    %75 = arith.addf %71, %74 : vector<8x48xf32>
    %c0_43 = arith.constant 0 : index
    %c0_44 = arith.constant 0 : index
    %76 = vector.load %arg17[%c0_43, %c0_44] : memref<1x48xf32, #tpu.memory_space<vmem>>, vector<1x48xf32>
    %77 = vector.broadcast %76 : vector<1x48xf32> to vector<8x48xf32>
    %78 = arith.addf %75, %77 : vector<8x48xf32>
    %cst_45 = arith.constant 5.000000e-01 : f32
    %79 = vector.broadcast %cst_45 : f32 to vector<8x48xf32>
    %80 = arith.mulf %79, %64 : vector<8x48xf32>
    %cst_46 = arith.constant 4.471500e-02 : f32
    %81 = vector.broadcast %cst_46 : f32 to vector<8x48xf32>
    %82 = arith.mulf %81, %64 : vector<8x48xf32>
    %83 = arith.mulf %82, %64 : vector<8x48xf32>
    %84 = arith.mulf %83, %64 : vector<8x48xf32>
    %85 = arith.addf %64, %84 : vector<8x48xf32>
    %cst_47 = arith.constant 0.797884583 : f32
    %86 = vector.broadcast %cst_47 : f32 to vector<8x48xf32>
    %87 = arith.mulf %86, %85 : vector<8x48xf32>
    %88 = math.tanh %87 : vector<8x48xf32>
    %cst_48 = arith.constant 1.000000e+00 : f32
    %89 = vector.broadcast %cst_48 : f32 to vector<8x48xf32>
    %90 = arith.addf %89, %88 : vector<8x48xf32>
    %91 = arith.mulf %80, %90 : vector<8x48xf32>
    %cst_49 = arith.constant 5.000000e-01 : f32
    %92 = vector.broadcast %cst_49 : f32 to vector<8x48xf32>
    %93 = arith.mulf %92, %78 : vector<8x48xf32>
    %cst_50 = arith.constant 4.471500e-02 : f32
    %94 = vector.broadcast %cst_50 : f32 to vector<8x48xf32>
    %95 = arith.mulf %94, %78 : vector<8x48xf32>
    %96 = arith.mulf %95, %78 : vector<8x48xf32>
    %97 = arith.mulf %96, %78 : vector<8x48xf32>
    %98 = arith.addf %78, %97 : vector<8x48xf32>
    %cst_51 = arith.constant 0.797884583 : f32
    %99 = vector.broadcast %cst_51 : f32 to vector<8x48xf32>
    %100 = arith.mulf %99, %98 : vector<8x48xf32>
    %101 = math.tanh %100 : vector<8x48xf32>
    %cst_52 = arith.constant 1.000000e+00 : f32
    %102 = vector.broadcast %cst_52 : f32 to vector<8x48xf32>
    %103 = arith.addf %102, %101 : vector<8x48xf32>
    %104 = arith.mulf %93, %103 : vector<8x48xf32>
    %105 = arith.mulf %64, %104 : vector<8x48xf32>
    %106 = arith.mulf %78, %91 : vector<8x48xf32>
    %107 = arith.addf %105, %106 : vector<8x48xf32>
    %108 = arith.truncf %107 : vector<8x48xf32> to vector<8x48xbf16>
    %c0_53 = arith.constant 0 : index
    %c0_54 = arith.constant 0 : index
    %109 = vector.load %arg18[%c0_53, %c0_54] : memref<48x16xbf16, #tpu.memory_space<vmem>>, vector<48x16xbf16>
    %cst_55 = arith.constant dense<0.000000e+00> : vector<8x16xf32>
    %110 = tpu.matmul %108, %109, %cst_55 {dimension_numbers = #tpu.dot_dimension_numbers<[1], [0], [0], [1], [0, 0, 1, 1], [], []>} : vector<8x48xbf16>, vector<48x16xbf16>, vector<8x16xf32> -> vector<8x16xf32>
    %c0_56 = arith.constant 0 : index
    %c0_57 = arith.constant 0 : index
    %111 = vector.load %arg19[%c0_56, %c0_57] : memref<1x16xf32, #tpu.memory_space<vmem>>, vector<1x16xf32>
    %112 = vector.broadcast %111 : vector<1x16xf32> to vector<8x16xf32>
    %113 = arith.addf %110, %112 : vector<8x16xf32>
    %c0_58 = arith.constant 0 : index
    %c0_59 = arith.constant 0 : index
    %c0_60 = arith.constant 0 : index
    %114 = vector.load %arg2[%c0_58, %c0_59, %c0_60] : memref<1x8x16xf32, #tpu.memory_space<vmem>>, vector<1x8x16xf32>
    %115 = vector.shape_cast %114 : vector<1x8x16xf32> to vector<8x16xf32>
    %116 = arith.addf %115, %113 : vector<8x16xf32>
    %c0_61 = arith.constant 0 : index
    %c0_62 = arith.constant 0 : index
    %c0_63 = arith.constant 0 : index
    %117 = vector.load %arg20[%c0_61, %c0_62, %c0_63] : memref<1x8x16xf32, #tpu.memory_space<vmem>>, vector<1x8x16xf32>
    %118 = vector.shape_cast %117 : vector<1x8x16xf32> to vector<8x16xf32>
    %119 = vector.shape_cast %116 : vector<8x16xf32> to vector<1x8x16xf32>
    tpu.vector_store %arg20[%c0_61, %c0_62, %c0_63], %119 {strides = array<i32>} : memref<1x8x16xf32, #tpu.memory_space<vmem>>, vector<1x8x16xf32>,
    return
  }
  func.func @transform_0(%arg0: i32) -> i32 {
    %c0_i32 = arith.constant 0 : i32
    %c0_i32_0 = arith.constant 0 : i32
    return %c0_i32 : i32
  }
  func.func @transform_1(%arg0: i32) -> (i32, i32, i32) {
    %c0_i32 = arith.constant 0 : i32
    %c0_i32_0 = arith.constant 0 : i32
    %c0_i32_1 = arith.constant 0 : i32
    return %arg0, %c0_i32, %c0_i32_0 : i32, i32, i32
  }
  func.func @transform_2(%arg0: i32) -> (i32, i32, i32) {
    %c0_i32 = arith.constant 0 : i32
    %c0_i32_0 = arith.constant 0 : i32
    %c0_i32_1 = arith.constant 0 : i32
    return %arg0, %c0_i32, %c0_i32_0 : i32, i32, i32
  }
  func.func @transform_3(%arg0: i32) -> (i32, i32, i32) {
    %c0_i32 = arith.constant 0 : i32
    %c0_i32_0 = arith.constant 0 : i32
    %c0_i32_1 = arith.constant 0 : i32
    return %arg0, %c0_i32, %c0_i32_0 : i32, i32, i32
  }
  func.func @transform_4(%arg0: i32) -> (i32, i32) {
    %c0_i32 = arith.constant 0 : i32
    %c0_i32_0 = arith.constant 0 : i32
    %c0_i32_1 = arith.constant 0 : i32
    return %c0_i32, %c0_i32_0 : i32, i32
  }
  func.func @transform_5(%arg0: i32) -> (i32, i32) {
    %c0_i32 = arith.constant 0 : i32
    %c0_i32_0 = arith.constant 0 : i32
    %c0_i32_1 = arith.constant 0 : i32
    return %c0_i32, %c0_i32_0 : i32, i32
  }
  func.func @transform_6(%arg0: i32) -> (i32, i32) {
    %c0_i32 = arith.constant 0 : i32
    %c0_i32_0 = arith.constant 0 : i32
    %c0_i32_1 = arith.constant 0 : i32
    return %c0_i32, %c0_i32_0 : i32, i32
  }
  func.func @transform_7(%arg0: i32) -> (i32, i32) {
    %c0_i32 = arith.constant 0 : i32
    %c0_i32_0 = arith.constant 0 : i32
    %c0_i32_1 = arith.constant 0 : i32
    return %c0_i32, %c0_i32_0 : i32, i32
  }
  func.func @transform_8(%arg0: i32) -> (i32, i32) {
    %c0_i32 = arith.constant 0 : i32
    %c0_i32_0 = arith.constant 0 : i32
    %c0_i32_1 = arith.constant 0 : i32
    return %c0_i32, %c0_i32_0 : i32, i32
  }
  func.func @transform_9(%arg0: i32) -> (i32, i32) {
    %c0_i32 = arith.constant 0 : i32
    %c0_i32_0 = arith.constant 0 : i32
    %c0_i32_1 = arith.constant 0 : i32
    return %c0_i32, %c0_i32_0 : i32, i32
  }
  func.func @transform_10(%arg0: i32) -> (i32, i32) {
    %c0_i32 = arith.constant 0 : i32
    %c0_i32_0 = arith.constant 0 : i32
    %c0_i32_1 = arith.constant 0 : i32
    return %c0_i32, %c0_i32_0 : i32, i32
  }
  func.func @transform_11(%arg0: i32) -> (i32, i32) {
    %c0_i32 = arith.constant 0 : i32
    %c0_i32_0 = arith.constant 0 : i32
    %c0_i32_1 = arith.constant 0 : i32
    return %c0_i32, %c0_i32_0 : i32, i32
  }
  func.func @transform_12(%arg0: i32) -> (i32, i32) {
    %c0_i32 = arith.constant 0 : i32
    %c0_i32_0 = arith.constant 0 : i32
    %c0_i32_1 = arith.constant 0 : i32
    return %c0_i32, %c0_i32_0 : i32, i32
  }
  func.func @transform_13(%arg0: i32) -> (i32, i32) {
    %c0_i32 = arith.constant 0 : i32
    %c0_i32_0 = arith.constant 0 : i32
    %c0_i32_1 = arith.constant 0 : i32
    return %c0_i32, %c0_i32_0 : i32, i32
  }
  func.func @transform_14(%arg0: i32) -> (i32, i32) {
    %c0_i32 = arith.constant 0 : i32
    %c0_i32_0 = arith.constant 0 : i32
    %c0_i32_1 = arith.constant 0 : i32
    return %c0_i32, %c0_i32_0 : i32, i32
  }
  func.func @transform_15(%arg0: i32) -> (i32, i32, i32) {
    %c0_i32 = arith.constant 0 : i32
    %c0_i32_0 = arith.constant 0 : i32
    %c0_i32_1 = arith.constant 0 : i32
    %c0_i32_2 = arith.constant 0 : i32
    return %c0_i32, %c0_i32_0, %c0_i32_1 : i32, i32, i32
  }
  func.func @transform_16(%arg0: i32) -> (i32, i32) {
    %c0_i32 = arith.constant 0 : i32
    %c0_i32_0 = arith.constant 0 : i32
    %c0_i32_1 = arith.constant 0 : i32
    return %c0_i32, %c0_i32_0 : i32, i32
  }
  func.func @transform_17(%arg0: i32) -> (i32, i32) {
    %c0_i32 = arith.constant 0 : i32
    %c0_i32_0 = arith.constant 0 : i32
    %c0_i32_1 = arith.constant 0 : i32
    return %c0_i32, %c0_i32_0 : i32, i32
  }
  func.func @transform_18(%arg0: i32) -> (i32, i32) {
    %c0_i32 = arith.constant 0 : i32
    %c0_i32_0 = arith.constant 0 : i32
    %c0_i32_1 = arith.constant 0 : i32
    return %c0_i32, %c0_i32_0 : i32, i32
  }
  func.func @transform_19(%arg0: i32) -> (i32, i32, i32) {
    %c0_i32 = arith.constant 0 : i32
    %c0_i32_0 = arith.constant 0 : i32
    %c0_i32_1 = arith.constant 0 : i32
    return %arg0, %c0_i32, %c0_i32_0 : i32, i32, i32
  }
}

</mosaic_0001>

<llo_original>
// kernel: reverse.4
$region0: #{reverse.4}
  %s0 = inlined_call_operand.vmem [shape: f32[5,3], index: 0, kind: input, shape index: {}]
  %s1 = inlined_call_operand.vmem [shape: f32[5,3], index: 1, kind: output, shape index: {}]
  %v2 = vlaneseq
  %v3 = vsub.s32 2, %v2
  %4 = vset.pattern.permute.xlu0 %v3
  $region1: #{reverse.4} parent=0
    #allocation0 [shape = 'u8[4096]{0}', space=vmem, size = 0x1000, scoped, tag = 'operand span for operand 0']
    #allocation1 [shape = 'u8[4096]{0}', space=vmem, size = 0x1000, scoped, tag = 'operand span for operand 1']
    // Predicated region
    $region2: #{reverse.4} parent=1 // pred_check
      _
    $region3: #{reverse.4} parent=1 // pred_check_branch
      %6 = sbr.rel (0) target = $region5
    $region4: #{reverse.4} parent=1 // pred_region
      // Predicated region
      $region6: #{reverse.4} parent=4 // pred_check
        _
      $region7: #{reverse.4} parent=4 // pred_check_branch
        %8 = sbr.rel (0) target = $region9
      $region8: #{reverse.4} parent=4 // pred_region
        // Predicated region
        $region21: #{reverse.4} parent=8 // pred_check
          _
        $region22: #{reverse.4} parent=8 // pred_check_branch
          %23 = sbr.rel (0) target = $region24
        $region23: #{reverse.4} parent=8 // pred_region
          loop: start=0, step=1, limit=1
          $region25: #{reverse.4} parent=23 // loop_pre_header
            _
          $region26: #{reverse.4} parent=23 // loop_header
            %s25 = sphi 0, %s29
            %p26 = scmp.ge.s32.totalorder %s25, 1
            %s30 = sphi %s0, %s0
            %s31 = sphi [#allocation0], [#allocation0]
          $region27: #{reverse.4} parent=23 // loop_header_branch
            %28 = sbr.rel (%p26) target = $region31
          $region28: #{reverse.4} parent=23 // loop_body
            %v32 = vld [vmem:[%s30] sm:$0xff]
            %33 = vst [vmem:[%s31] sm:$0xff] %v32
          $region29: #{reverse.4} parent=23 // loop_footer
            %s29 = sadd.s32 1, %s25
          $region30: #{reverse.4} parent=23 // loop_footer_branch
            %24 = sbr.rel target = $region26
          $region31: #{reverse.4} parent=23 // loop_exit
            _
        $region24: #{reverse.4} parent=8 // pred_fallthru
          _
        // Predicated region
        $region32: #{reverse.4} parent=8 // pred_check
          _
        $region33: #{reverse.4} parent=8 // pred_check_branch
          %35 = sbr.rel target = $region35
        $region34: #{reverse.4} parent=8 // pred_region
          _
        $region35: #{reverse.4} parent=8 // pred_fallthru
          _
      $region9: #{reverse.4} parent=4 // pred_fallthru
        _
      // Predicated region
      $region10: #{reverse.4} parent=4 // pred_check
        _
      $region11: #{reverse.4} parent=4 // pred_check_branch
        %10 = sbr.rel target = $region13
      $region12: #{reverse.4} parent=4 // pred_region
        loop: start=0, step=1, limit=1
        $region14: #{reverse.4} parent=12 // loop_pre_header
          _
        $region15: #{reverse.4} parent=12 // loop_header
          %s13 = sphi 0, %s17
          %p14 = scmp.ge.s32.totalorder %s13, 1
          %s18 = sphi %s0, %s0
          %s19 = sphi [#allocation0], [#allocation0]
        $region16: #{reverse.4} parent=12 // loop_header_branch
          %16 = sbr.rel (%p14) target = $region20
        $region17: #{reverse.4} parent=12 // loop_body
          %v20 = vld [vmem:[%s18] sm:$0xff]
          %21 = vst [vmem:[%s19] sm:$0xff] %v20
        $region18: #{reverse.4} parent=12 // loop_footer
          %s17 = sadd.s32 1, %s13
        $region19: #{reverse.4} parent=12 // loop_footer_branch
          %12 = sbr.rel target = $region15
        $region20: #{reverse.4} parent=12 // loop_exit
          _
      $region13: #{reverse.4} parent=4 // pred_fallthru
        _
    $region5: #{reverse.4} parent=1 // pred_fallthru
      _
    %36 = vnop
    %v37 = vld [vmem:[#allocation0] sm:$0xff]
    %38 = vperm.xlu0 %4, %v37
    %v39 = vpop.permute.xlu0 %38
    %40 = vst [vmem:[#allocation1] sm:$0xff] %v39
    // Predicated region
    $region36: #{reverse.4} parent=1 // pred_check
      _
    $region37: #{reverse.4} parent=1 // pred_check_branch
      %42 = sbr.rel (0) target = $region39
    $region38: #{reverse.4} parent=1 // pred_region
      // Predicated region
      $region40: #{reverse.4} parent=38 // pred_check
        _
      $region41: #{reverse.4} parent=38 // pred_check_branch
        %44 = sbr.rel (0) target = $region43
      $region42: #{reverse.4} parent=38 // pred_region
        // Predicated region
        $region55: #{reverse.4} parent=42 // pred_check
          _
        $region56: #{reverse.4} parent=42 // pred_check_branch
          %59 = sbr.rel (0) target = $region58
        $region57: #{reverse.4} parent=42 // pred_region
          loop: start=0, step=1, limit=1
          $region59: #{reverse.4} parent=57 // loop_pre_header
            _
          $region60: #{reverse.4} parent=57 // loop_header
            %s61 = sphi 0, %s65
            %p62 = scmp.ge.s32.totalorder %s61, 1
            %s66 = sphi [#allocation1], [#allocation1]
            %s67 = sphi %s1, %s1
          $region61: #{reverse.4} parent=57 // loop_header_branch
            %64 = sbr.rel (%p62) target = $region65
          $region62: #{reverse.4} parent=57 // loop_body
            %v68 = vld [vmem:[%s66] sm:$0xff]
            %69 = vst [vmem:[%s67] sm:$0xff] %v68
          $region63: #{reverse.4} parent=57 // loop_footer
            %s65 = sadd.s32 1, %s61
          $region64: #{reverse.4} parent=57 // loop_footer_branch
            %60 = sbr.rel target = $region60
          $region65: #{reverse.4} parent=57 // loop_exit
            _
        $region58: #{reverse.4} parent=42 // pred_fallthru
          _
        // Predicated region
        $region66: #{reverse.4} parent=42 // pred_check
          _
        $region67: #{reverse.4} parent=42 // pred_check_branch
          %71 = sbr.rel target = $region69
        $region68: #{reverse.4} parent=42 // pred_region
          _
        $region69: #{reverse.4} parent=42 // pred_fallthru
          _
      $region43: #{reverse.4} parent=38 // pred_fallthru
        _
      // Predicated region
      $region44: #{reverse.4} parent=38 // pred_check
        _
      $region45: #{reverse.4} parent=38 // pred_check_branch
        %46 = sbr.rel target = $region47
      $region46: #{reverse.4} parent=38 // pred_region
        loop: start=0, step=1, limit=1
        $region48: #{reverse.4} parent=46 // loop_pre_header
          _
        $region49: #{reverse.4} parent=46 // loop_header
          %s49 = sphi 0, %s53
          %p50 = scmp.ge.s32.totalorder %s49, 1
          %s54 = sphi [#allocation1], [#allocation1]
          %s55 = sphi %s1, %s1
        $region50: #{reverse.4} parent=46 // loop_header_branch
          %52 = sbr.rel (%p50) target = $region54
        $region51: #{reverse.4} parent=46 // loop_body
          %v56 = vld [vmem:[%s54] sm:$0xff]
          %57 = vst [vmem:[%s55] sm:$0xff] %v56
        $region52: #{reverse.4} parent=46 // loop_footer
          %s53 = sadd.s32 1, %s49
        $region53: #{reverse.4} parent=46 // loop_footer_branch
          %48 = sbr.rel target = $region49
        $region54: #{reverse.4} parent=46 // loop_exit
          _
      $region47: #{reverse.4} parent=38 // pred_fallthru
        _
    $region39: #{reverse.4} parent=1 // pred_fallthru
      _
    %72 = vnop

// kernel: tslanet_layer.2
$region0: #{tslanet_layer.2}
  #allocation0 [shape = 'u32[]', space=smem, size = 0x4, offset = 0x4, fixed_abs, tag = 'smem constant byte address 0x4 - core index']
  #allocation1 [shape = 'u32[144,128]{1,0:T(1,128)}', space=vmem, size = 0x12000, scoped, tag = 'internal scratch']
  %s0 = inlined_call_operand.vmem [shape: f32[2,8,16], index: 0, kind: input, shape index: {}]
  %s1 = inlined_call_operand.vmem [shape: f32[16,16], index: 1, kind: input, shape index: {}]
  %s2 = inlined_call_operand.vmem [shape: f32[16,1], index: 2, kind: input, shape index: {}]
  %s3 = inlined_call_operand.vmem [shape: f32[1,16], index: 3, kind: input, shape index: {}]
  %s4 = inlined_call_operand.vmem [shape: f32[1,16], index: 4, kind: input, shape index: {}]
  %s5 = inlined_call_operand.vmem [shape: bf16[16,8], index: 5, kind: input, shape index: {}]
  %s6 = inlined_call_operand.vmem [shape: bf16[2,16,16], index: 6, kind: output, shape index: {0}]
  %s7 = inlined_call_operand.vmem [shape: f32[2,8,1], index: 7, kind: output, shape index: {1}]
  %8 = xla_tuple %s6, %s7
  %s9 = sld [smem:[#allocation0]]
  $region65: #{tslanet_layer.2} parent=0
    _
  %s11 = ssub.s32 1, %s9
  %s12 = scalar_select 0, %s11, %s9
  loop: start=0, step=1, limit=4
  $region2: #{tslanet_layer.2} parent=0 // loop_pre_header
    _
  $region3: #{tslanet_layer.2} parent=0 // loop_header
    %s14 = sphi 0, %s18
    %p15 = scmp.ge.s32.totalorder %s14, 4
    %s24 = sphi 0, %s26
    %s27 = sphi 0, %s24
    %s28 = sphi 0, %s27
    %s44 = sphi 0, %s28
    %s48 = sphi 0, %s48
    %s50 = sphi 0, %s48
    %s51 = sphi 0, %s50
    %s65 = sphi 0, %s51
    %s69 = sphi 0, %s69
    %s71 = sphi 0, %s69
    %s72 = sphi 0, %s71
    %s86 = sphi 0, %s72
    %s90 = sphi 0, %s90
    %s92 = sphi 0, %s90
    %s93 = sphi 0, %s92
    %s107 = sphi 0, %s93
    %s111 = sphi 0, %s111
    %s113 = sphi 0, %s111
    %s114 = sphi 0, %s113
    %s128 = sphi 0, %s114
    %s132 = sphi 0, %s132
    %s134 = sphi 0, %s132
    %s135 = sphi 0, %s134
    %s149 = sphi 0, %s135
    %s155 = sphi 0, %s157
    %s158 = sphi 0, %s155
    %s159 = sphi 0, %s158
    %s175 = sphi 0, %s159
    %s181 = sphi 0, %s183
    %s184 = sphi 0, %s181
    %s185 = sphi 0, %s184
    %s201 = sphi 0, %s185
  $region4: #{tslanet_layer.2} parent=0 // loop_header_branch
    %17 = sbr.rel (%p15) target = $region8
  $region5: #{tslanet_layer.2} parent=0 // loop_body
    %s19 = ssub.s32 %s14, 1
    %s20 = ssub.s32 %s14, 2
    %s21 = sadd.s32 %s14, 1
    %s22 = ssub.s32 %s14, %s21
    %p23 = scmp.eq.s32.totalorder %s22, 0
    %s25 = sadd.s32 %s24, 1
    %s26 = scalar_select %p23, %s24, %s25
    %p29 = pneg %p23
    %p30 = scmp.eq.s32.totalorder %s14, 1
    %p31 = por %p29, %p30
    %p32 = scmp.ne.s32.totalorder %s24, %s27
    %p33 = scmp.eq.s32.totalorder %s14, 0
    %p34 = por %p32, %p33
    %p35 = scmp.ne.s32.totalorder %s24, %s27
    %p36 = scmp.eq.s32.totalorder %s19, 1
    %p37 = por %p35, %p36
    %p38 = scmp.ne.s32.totalorder %s27, %s28
    %p39 = scmp.eq.s32.totalorder %s19, 0
    %p40 = por %p38, %p39
    %p41 = scmp.ne.s32.totalorder %s27, %s28
    %p42 = scmp.eq.s32.totalorder %s20, 1
    %p43 = por %p41, %p42
    %p45 = scmp.ne.s32.totalorder %s28, %s44
    %p46 = scmp.eq.s32.totalorder %s20, 0
    %p47 = por %p45, %p46
    %s49 = sadd.s32 %s48, 1
    %p52 = scmp.eq.s32.totalorder %s14, 1
    %p53 = scmp.ne.s32.totalorder %s48, %s50
    %p54 = scmp.eq.s32.totalorder %s14, 0
    %p55 = por %p53, %p54
    %p56 = scmp.ne.s32.totalorder %s48, %s50
    %p57 = scmp.eq.s32.totalorder %s19, 1
    %p58 = por %p56, %p57
    %p59 = scmp.ne.s32.totalorder %s50, %s51
    %p60 = scmp.eq.s32.totalorder %s19, 0
    %p61 = por %p59, %p60
    %p62 = scmp.ne.s32.totalorder %s50, %s51
    %p63 = scmp.eq.s32.totalorder %s20, 1
    %p64 = por %p62, %p63
    %p66 = scmp.ne.s32.totalorder %s51, %s65
    %p67 = scmp.eq.s32.totalorder %s20, 0
    %p68 = por %p66, %p67
    %s70 = sadd.s32 %s69, 1
    %p73 = scmp.eq.s32.totalorder %s14, 1
    %p74 = scmp.ne.s32.totalorder %s69, %s71
    %p75 = scmp.eq.s32.totalorder %s14, 0
    %p76 = por %p74, %p75
    %p77 = scmp.ne.s32.totalorder %s69, %s71
    %p78 = scmp.eq.s32.totalorder %s19, 1
    %p79 = por %p77, %p78
    %p80 = scmp.ne.s32.totalorder %s71, %s72
    %p81 = scmp.eq.s32.totalorder %s19, 0
    %p82 = por %p80, %p81
    %p83 = scmp.ne.s32.totalorder %s71, %s72
    %p84 = scmp.eq.s32.totalorder %s20, 1
    %p85 = por %p83, %p84
    %p87 = scmp.ne.s32.totalorder %s72, %s86
    %p88 = scmp.eq.s32.totalorder %s20, 0
    %p89 = por %p87, %p88
    %s91 = sadd.s32 %s90, 1
    %p94 = scmp.eq.s32.totalorder %s14, 1
    %p95 = scmp.ne.s32.totalorder %s90, %s92
    %p96 = scmp.eq.s32.totalorder %s14, 0
    %p97 = por %p95, %p96
    %p98 = scmp.ne.s32.totalorder %s90, %s92
    %p99 = scmp.eq.s32.totalorder %s19, 1
    %p100 = por %p98, %p99
    %p101 = scmp.ne.s32.totalorder %s92, %s93
    %p102 = scmp.eq.s32.totalorder %s19, 0
    %p103 = por %p101, %p102
    %p104 = scmp.ne.s32.totalorder %s92, %s93
    %p105 = scmp.eq.s32.totalorder %s20, 1
    %p106 = por %p104, %p105
    %p108 = scmp.ne.s32.totalorder %s93, %s107
    %p109 = scmp.eq.s32.totalorder %s20, 0
    %p110 = por %p108, %p109
    %s112 = sadd.s32 %s111, 1
    %p115 = scmp.eq.s32.totalorder %s14, 1
    %p116 = scmp.ne.s32.totalorder %s111, %s113
    %p117 = scmp.eq.s32.totalorder %s14, 0
    %p118 = por %p116, %p117
    %p119 = scmp.ne.s32.totalorder %s111, %s113
    %p120 = scmp.eq.s32.totalorder %s19, 1
    %p121 = por %p119, %p120
    %p122 = scmp.ne.s32.totalorder %s113, %s114
    %p123 = scmp.eq.s32.totalorder %s19, 0
    %p124 = por %p122, %p123
    %p125 = scmp.ne.s32.totalorder %s113, %s114
    %p126 = scmp.eq.s32.totalorder %s20, 1
    %p127 = por %p125, %p126
    %p129 = scmp.ne.s32.totalorder %s114, %s128
    %p130 = scmp.eq.s32.totalorder %s20, 0
    %p131 = por %p129, %p130
    %s133 = sadd.s32 %s132, 1
    %p136 = scmp.eq.s32.totalorder %s14, 1
    %p137 = scmp.ne.s32.totalorder %s132, %s134
    %p138 = scmp.eq.s32.totalorder %s14, 0
    %p139 = por %p137, %p138
    %p140 = scmp.ne.s32.totalorder %s132, %s134
    %p141 = scmp.eq.s32.totalorder %s19, 1
    %p142 = por %p140, %p141
    %p143 = scmp.ne.s32.totalorder %s134, %s135
    %p144 = scmp.eq.s32.totalorder %s19, 0
    %p145 = por %p143, %p144
    %p146 = scmp.ne.s32.totalorder %s134, %s135
    %p147 = scmp.eq.s32.totalorder %s20, 1
    %p148 = por %p146, %p147
    %p150 = scmp.ne.s32.totalorder %s135, %s149
    %p151 = scmp.eq.s32.totalorder %s20, 0
    %p152 = por %p150, %p151
    %s153 = ssub.s32 %s14, %s21
    %p154 = scmp.eq.s32.totalorder %s153, 0
    %s156 = sadd.s32 %s155, 1
    %s157 = scalar_select %p154, %s155, %s156
    %p160 = pneg %p154
    %p161 = scmp.eq.s32.totalorder %s14, 1
    %p162 = por %p160, %p161
    %p163 = scmp.ne.s32.totalorder %s155, %s158
    %p164 = scmp.eq.s32.totalorder %s14, 0
    %p165 = por %p163, %p164
    %p166 = scmp.ne.s32.totalorder %s155, %s158
    %p167 = scmp.eq.s32.totalorder %s19, 1
    %p168 = por %p166, %p167
    %p169 = scmp.ne.s32.totalorder %s158, %s159
    %p170 = scmp.eq.s32.totalorder %s19, 0
    %p171 = por %p169, %p170
    %p172 = scmp.ne.s32.totalorder %s158, %s159
    %p173 = scmp.eq.s32.totalorder %s20, 1
    %p174 = por %p172, %p173
    %p176 = scmp.ne.s32.totalorder %s159, %s175
    %p177 = scmp.eq.s32.totalorder %s20, 0
    %p178 = por %p176, %p177
    %s179 = ssub.s32 %s14, %s21
    %p180 = scmp.eq.s32.totalorder %s179, 0
    %s182 = sadd.s32 %s181, 1
    %s183 = scalar_select %p180, %s181, %s182
    %p186 = pneg %p180
    %p187 = scmp.eq.s32.totalorder %s14, 1
    %p188 = por %p186, %p187
    %p189 = scmp.ne.s32.totalorder %s181, %s184
    %p190 = scmp.eq.s32.totalorder %s14, 0
    %p191 = por %p189, %p190
    %p192 = scmp.ne.s32.totalorder %s181, %s184
    %p193 = scmp.eq.s32.totalorder %s19, 1
    %p194 = por %p192, %p193
    %p195 = scmp.ne.s32.totalorder %s184, %s185
    %p196 = scmp.eq.s32.totalorder %s19, 0
    %p197 = por %p195, %p196
    %p198 = scmp.ne.s32.totalorder %s184, %s185
    %p199 = scmp.eq.s32.totalorder %s20, 1
    %p200 = por %p198, %p199
    %p202 = scmp.ne.s32.totalorder %s185, %s201
    %p203 = scmp.eq.s32.totalorder %s20, 0
    %p204 = por %p202, %p203
    %p205 = scmp.le.s32.totalorder 1, %s14
    %p206 = scmp.lt.s32.totalorder %s14, 3
    %p207 = pnand %p205, %p206
    %p208 = pneg %p207
    // Predicated region
    $region9: #{tslanet_layer.2} parent=5 // pred_check
      _
    $region10: #{tslanet_layer.2} parent=5 // pred_check_branch
      %210 = sbr.rel (%p207) target = $region12
    $region11: #{tslanet_layer.2} parent=5 // pred_region
      %s211 = ssub.s32 %s14, 1
      // Predicated region
      $region13: #{tslanet_layer.2} parent=11 // pred_check
        %p212 = pneg %p61
      $region14: #{tslanet_layer.2} parent=11 // pred_check_branch
        %214 = sbr.rel (%p212) target = $region16
      $region15: #{tslanet_layer.2} parent=11 // pred_region
        _
      $region16: #{tslanet_layer.2} parent=11 // pred_fallthru
        _
      // Predicated region
      $region17: #{tslanet_layer.2} parent=11 // pred_check
        %p215 = pneg %p82
      $region18: #{tslanet_layer.2} parent=11 // pred_check_branch
        %217 = sbr.rel (%p215) target = $region20
      $region19: #{tslanet_layer.2} parent=11 // pred_region
        _
      $region20: #{tslanet_layer.2} parent=11 // pred_fallthru
        _
      // Predicated region
      $region21: #{tslanet_layer.2} parent=11 // pred_check
        %p218 = pneg %p103
      $region22: #{tslanet_layer.2} parent=11 // pred_check_branch
        %220 = sbr.rel (%p218) target = $region24
      $region23: #{tslanet_layer.2} parent=11 // pred_region
        _
      $region24: #{tslanet_layer.2} parent=11 // pred_fallthru
        _
      // Predicated region
      $region25: #{tslanet_layer.2} parent=11 // pred_check
        %p221 = pneg %p124
      $region26: #{tslanet_layer.2} parent=11 // pred_check_branch
        %223 = sbr.rel (%p221) target = $region28
      $region27: #{tslanet_layer.2} parent=11 // pred_region
        _
      $region28: #{tslanet_layer.2} parent=11 // pred_fallthru
        _
      // Predicated region
      $region29: #{tslanet_layer.2} parent=11 // pred_check
        %p224 = pneg %p145
      $region30: #{tslanet_layer.2} parent=11 // pred_check_branch
        %226 = sbr.rel (%p224) target = $region32
      $region31: #{tslanet_layer.2} parent=11 // pred_region
        _
      $region32: #{tslanet_layer.2} parent=11 // pred_fallthru
        _
    $region12: #{tslanet_layer.2} parent=5 // pred_fallthru
      _
    %p227 = scmp.lt.s32.totalorder %s14, 2
    // Predicated region
    $region33: #{tslanet_layer.2} parent=5 // pred_check
      %p228 = pneg %p227
    $region34: #{tslanet_layer.2} parent=5 // pred_check_branch
      %230 = sbr.rel (%p228) target = $region36
    $region35: #{tslanet_layer.2} parent=5 // pred_region
      // Predicated region
      $region37: #{tslanet_layer.2} parent=35 // pred_check
        %p231 = pneg %p34
      $region38: #{tslanet_layer.2} parent=35 // pred_check_branch
        %233 = sbr.rel (%p231) target = $region40
      $region39: #{tslanet_layer.2} parent=35 // pred_region
        %p234 = scmp.lt.s32.totalorder %s14, 1
        %s235 = scalar_select %p234, %s14, 1
        %s236 = smul.addr %s235, 8
        %s237 = scalar_lea.vmem %s0, %s236
      $region40: #{tslanet_layer.2} parent=35 // pred_fallthru
        _
    $region36: #{tslanet_layer.2} parent=5 // pred_fallthru
      _
    %p238 = scmp.le.s32.totalorder 1, %s14
    %p239 = scmp.lt.s32.totalorder %s14, 3
    %p240 = pnand %p238, %p239
    %p241 = pneg %p240
    // Predicated region
    $region41: #{tslanet_layer.2} parent=5 // pred_check
      _
    $region42: #{tslanet_layer.2} parent=5 // pred_check_branch
      %243 = sbr.rel (%p240) target = $region44
    $region43: #{tslanet_layer.2} parent=5 // pred_region
      %s244 = ssub.s32 %s14, 1
      %p245 = scmp.lt.s32.totalorder %s19, 1
      %s246 = scalar_select %p245, %s19, 1
      %s247 = smul.addr %s246, 8
      %s248 = scalar_lea.vmem %s0, %s247
      %p249 = pneg %p40
      %p250 = pneg %p37
      %p251 = pneg %p61
      %p252 = pneg %p58
      %p253 = pneg %p82
      %p254 = pneg %p79
      %p255 = pneg %p103
      %p256 = pneg %p100
      %p257 = pneg %p124
      %p258 = pneg %p121
      %p259 = pneg %p145
      %p260 = pneg %p142
      %p261 = pneg %p171
      %p262 = pneg %p168
      %p263 = scmp.lt.s32.totalorder %s19, 1
      %s264 = scalar_select %p263, %s19, 1
      %s265 = smul.addr %s264, 2
      %s266 = smul.addr %s265, 4
      %s267 = scalar_lea.vmem %s6, %s266
      %p268 = pneg %p197
      %p269 = pneg %p194
      %p270 = scmp.lt.s32.totalorder %s19, 1
      %s271 = scalar_select %p270, %s19, 1
      %s272 = smul.addr %s271, 8
      %s273 = scalar_lea.vmem %s7, %s272
      %p274 = scmp.lt.s32.totalorder %s19, 1
      %s275 = scalar_select %p274, %s19, 1
      %s276 = smul.addr %s275, 8
      %s277 = scalar_lea.vmem %s0, %s276
      %p278 = scmp.lt.s32.totalorder %s19, 1
      %s279 = scalar_select %p278, %s19, 1
      %s280 = smul.addr %s279, 2
      %s281 = smul.addr %s280, 4
      %s282 = scalar_lea.vmem %s6, %s281
      %p283 = scmp.lt.s32.totalorder %s19, 1
      %s284 = scalar_select %p283, %s19, 1
      %s285 = smul.addr %s284, 8
      %s286 = scalar_lea.vmem %s7, %s285
      %v288 = vld [vmem:[%s277] sm:$0xff]
      %v289 = vld [vmem:[%s1] sm:$0xff]
      %v290 = vld [vmem:[%s1 + $0x8] sm:$0xff]
      %vm291 = vcmask 130048
      %v293 = vsel %vm291, %v288, 0
      %295 = vmatprep.subr.mxu0 0.0
      %296 = vmatpush1.msra.mxu0 %v289
      %297 = vmatprep.subr.mxu0 0.0
      %298 = vmatpush1.msra.mxu0 %v290
      %299 = vmatprep.subr.mxu0 0.0
      %300 = vmatpush1.msra.mxu0 0.0
      %301 = vmatprep.subr.mxu0 0.0
      %302 = vmatpush1.msra.mxu0 0.0
      %303 = vmatprep.subr.mxu0 0.0
      %304 = vmatpush1.msra.mxu0 0.0
      %305 = vmatprep.subr.mxu0 0.0
      %306 = vmatpush1.msra.mxu0 0.0
      %307 = vmatprep.subr.mxu0 0.0
      %308 = vmatpush1.msra.mxu0 0.0
      %309 = vmatprep.subr.mxu0 0.0
      %310 = vmatpush1.msra.mxu0 0.0
      %311 = vmatprep.subr.mxu0 0.0
      %312 = vmatpush1.msra.mxu0 0.0
      %313 = vmatprep.subr.mxu0 0.0
      %314 = vmatpush1.msra.mxu0 0.0
      %315 = vmatprep.subr.mxu0 0.0
      %316 = vmatpush1.msra.mxu0 0.0
      %317 = vmatprep.subr.mxu0 0.0
      %318 = vmatpush1.msra.mxu0 0.0
      %319 = vmatprep.subr.mxu0 0.0
      %320 = vmatpush1.msra.mxu0 0.0
      %321 = vmatprep.subr.mxu0 0.0
      %322 = vmatpush1.msra.mxu0 0.0
      %323 = vmatprep.subr.mxu0 0.0
      %324 = vmatpush1.msra.mxu0 0.0
      %325 = vmatprep.subr.mxu0 0.0
      %326 = vmatpush1.msra.mxu0 0.0
      %327 = vmatprep.subr.mxu0 0.0
      %328 = vmatpush1.msra.mxu0 0.0
      %329 = vmatprep.subr.mxu0 0.0
      %330 = vmatpush1.msra.mxu0 0.0
      %331 = vmatprep.subr.mxu0 0.0
      %332 = vmatpush1.msra.mxu0 0.0
      %333 = vmatprep.subr.mxu0 0.0
      %334 = vmatpush1.msra.mxu0 0.0
      %335 = vmatprep.subr.mxu0 0.0
      %336 = vmatpush1.msra.mxu0 0.0
      %337 = vmatprep.subr.mxu0 0.0
      %338 = vmatpush1.msra.mxu0 0.0
      %339 = vmatprep.subr.mxu0 0.0
      %340 = vmatpush1.msra.mxu0 0.0
      %341 = vmatprep.subr.mxu0 0.0
      %342 = vmatpush1.msra.mxu0 0.0
      %343 = vmatprep.subr.mxu0 0.0
      %344 = vmatpush1.msra.mxu0 0.0
      %345 = vmatprep.subr.mxu0 0.0
      %346 = vmatpush1.msra.mxu0 0.0
      %347 = vmatprep.subr.mxu0 0.0
      %348 = vmatpush1.msra.mxu0 0.0
      %349 = vmatprep.subr.mxu0 0.0
      %350 = vmatpush1.msra.mxu0 0.0
      %351 = vmatprep.subr.mxu0 0.0
      %352 = vmatpush1.msra.mxu0 0.0
      %353 = vmatprep.subr.mxu0 0.0
      %354 = vmatpush1.msra.mxu0 0.0
      %355 = vmatprep.subr.mxu0 0.0
      %356 = vmatpush1.msra.mxu0 0.0
      %357 = vmatprep.subr.mxu0 0.0
      %358 = vmatpush1.msra.mxu0 0.0
      %359 = vmatprep.mubr.f32.mxu0 0.0
      %360 = vmatmul.mubr.f32.gmra.mrb[0].mxu0 %v293
      %v361 = vpop.f32.mrb[0].mxu0
      %v362 = vadd.f32 0.0, %v361
      %v363 = vpop.f32.mrb[0].mxu0
      %364 = vdwg.mxu0
      %v365 = vsub.f32 %v288, %v362
      %v366 = vmul.f32 %v365, %v365
      %v368 = vsel %vm291, %v366, 0
      %370 = vmatprep.subr.mxu0 0.0
      %371 = vmatpush1.msra.mxu0 %v289
      %372 = vmatprep.subr.mxu0 0.0
      %373 = vmatpush1.msra.mxu0 %v290
      %374 = vmatprep.subr.mxu0 0.0
      %375 = vmatpush1.msra.mxu0 0.0
      %376 = vmatprep.subr.mxu0 0.0
      %377 = vmatpush1.msra.mxu0 0.0
      %378 = vmatprep.subr.mxu0 0.0
      %379 = vmatpush1.msra.mxu0 0.0
      %380 = vmatprep.subr.mxu0 0.0
      %381 = vmatpush1.msra.mxu0 0.0
      %382 = vmatprep.subr.mxu0 0.0
      %383 = vmatpush1.msra.mxu0 0.0
      %384 = vmatprep.subr.mxu0 0.0
      %385 = vmatpush1.msra.mxu0 0.0
      %386 = vmatprep.subr.mxu0 0.0
      %387 = vmatpush1.msra.mxu0 0.0
      %388 = vmatprep.subr.mxu0 0.0
      %389 = vmatpush1.msra.mxu0 0.0
      %390 = vmatprep.subr.mxu0 0.0
      %391 = vmatpush1.msra.mxu0 0.0
      %392 = vmatprep.subr.mxu0 0.0
      %393 = vmatpush1.msra.mxu0 0.0
      %394 = vmatprep.subr.mxu0 0.0
      %395 = vmatpush1.msra.mxu0 0.0
      %396 = vmatprep.subr.mxu0 0.0
      %397 = vmatpush1.msra.mxu0 0.0
      %398 = vmatprep.subr.mxu0 0.0
      %399 = vmatpush1.msra.mxu0 0.0
      %400 = vmatprep.subr.mxu0 0.0
      %401 = vmatpush1.msra.mxu0 0.0
      %402 = vmatprep.subr.mxu0 0.0
      %403 = vmatpush1.msra.mxu0 0.0
      %404 = vmatprep.subr.mxu0 0.0
      %405 = vmatpush1.msra.mxu0 0.0
      %406 = vmatprep.subr.mxu0 0.0
      %407 = vmatpush1.msra.mxu0 0.0
      %408 = vmatprep.subr.mxu0 0.0
      %409 = vmatpush1.msra.mxu0 0.0
      %410 = vmatprep.subr.mxu0 0.0
      %411 = vmatpush1.msra.mxu0 0.0
      %412 = vmatprep.subr.mxu0 0.0
      %413 = vmatpush1.msra.mxu0 0.0
      %414 = vmatprep.subr.mxu0 0.0
      %415 = vmatpush1.msra.mxu0 0.0
      %416 = vmatprep.subr.mxu0 0.0
      %417 = vmatpush1.msra.mxu0 0.0
      %418 = vmatprep.subr.mxu0 0.0
      %419 = vmatpush1.msra.mxu0 0.0
      %420 = vmatprep.subr.mxu0 0.0
      %421 = vmatpush1.msra.mxu0 0.0
      %422 = vmatprep.subr.mxu0 0.0
      %423 = vmatpush1.msra.mxu0 0.0
      %424 = vmatprep.subr.mxu0 0.0
      %425 = vmatpush1.msra.mxu0 0.0
      %426 = vmatprep.subr.mxu0 0.0
      %427 = vmatpush1.msra.mxu0 0.0
      %428 = vmatprep.subr.mxu0 0.0
      %429 = vmatpush1.msra.mxu0 0.0
      %430 = vmatprep.subr.mxu0 0.0
      %431 = vmatpush1.msra.mxu0 0.0
      %432 = vmatprep.subr.mxu0 0.0
      %433 = vmatpush1.msra.mxu0 0.0
      %434 = vmatprep.mubr.f32.mxu0 0.0
      %435 = vmatmul.mubr.f32.gmra.mrb[0].mxu0 %v368
      %v436 = vpop.f32.mrb[0].mxu0
      %v437 = vadd.f32 1e-05, %v436
      %v438 = vpop.f32.mrb[0].mxu0
      %439 = vdwg.mxu0
      %v440 = vrsqrt.pop %v437
      %v441 = vmul.f32 %v365, %v440
      %v442 = vld [vmem:[%s3] sm:$0x1]
      %v444 = vlaneseq
      %v445 = vshrl.u32 %v444, 7
      %v446 = vsub.s32 0, %v445
      %v447 = vrot.slane %v442, %v446
      %v449 = vmul.f32 %v441, %v447
      %v450 = vld [vmem:[%s4] sm:$0x1]
      %v452 = vlaneseq
      %v453 = vshrl.u32 %v452, 7
      %v454 = vsub.s32 0, %v453
      %v455 = vrot.slane %v450, %v454
      %v457 = vadd.f32 %v449, %v455
      %v458 = vld [vmem:[%s5] sm:$0xf]
      %v459 = vld [vmem:[%s5 + $0x4] sm:$0xf]
      %v460 = vpack.c.bf16 %v457, %v457
      %v463 = vunpack.c.l.b16 %v458
      %v464 = vunpack.c.l.b16 %v459
      %v465 = vpack.c.b16 %v464, %v463
      %vm466 = vcmask 64512
      %v468 = vsel %vm466, %v465, 0
      %vm470 = vcmask 1043456
      %v472 = vsel %vm470, %v460, 0
      %474 = vmatprep.subr.bf16.mxu0 0
      %475 = vmatpush1.bf16.msra.mxu0 %v472
      %476 = vmatprep.subr.bf16.mxu0 0
      %477 = vmatpush1.bf16.msra.mxu0 0
      %478 = vmatprep.subr.bf16.mxu0 0
      %479 = vmatpush1.bf16.msra.mxu0 0
      %480 = vmatprep.subr.bf16.mxu0 0
      %481 = vmatpush1.bf16.msra.mxu0 0
      %482 = vmatprep.subr.bf16.mxu0 0
      %483 = vmatpush1.bf16.msra.mxu0 0
      %484 = vmatprep.subr.bf16.mxu0 0
      %485 = vmatpush1.bf16.msra.mxu0 0
      %486 = vmatprep.subr.bf16.mxu0 0
      %487 = vmatpush1.bf16.msra.mxu0 0
      %488 = vmatprep.subr.bf16.mxu0 0
      %489 = vmatpush1.bf16.msra.mxu0 0
      %490 = vmatprep.subr.bf16.mxu0 0
      %491 = vmatpush1.bf16.msra.mxu0 0
      %492 = vmatprep.subr.bf16.mxu0 0
      %493 = vmatpush1.bf16.msra.mxu0 0
      %494 = vmatprep.subr.bf16.mxu0 0
      %495 = vmatpush1.bf16.msra.mxu0 0
      %496 = vmatprep.subr.bf16.mxu0 0
      %497 = vmatpush1.bf16.msra.mxu0 0
      %498 = vmatprep.subr.bf16.mxu0 0
      %499 = vmatpush1.bf16.msra.mxu0 0
      %500 = vmatprep.subr.bf16.mxu0 0
      %501 = vmatpush1.bf16.msra.mxu0 0
      %502 = vmatprep.subr.bf16.mxu0 0
      %503 = vmatpush1.bf16.msra.mxu0 0
      %504 = vmatprep.subr.bf16.mxu0 0
      %505 = vmatpush1.bf16.msra.mxu0 0
      %506 = vmatprep.mubr.bf16.mxu0 0
      %507 = vmatmul.mubr.bf16.gmra.mrb[0].mxu0 %v468
      %v508 = vpop.f32.mrb[0].mxu0
      %v509 = vadd.f32 0.0, %v508
      %v510 = vpop.f32.mrb[0].mxu0
      %v511 = vpop.f32.mrb[0].mxu0
      %v512 = vadd.f32 0.0, %v511
      %v513 = vpop.f32.mrb[0].mxu0
      %514 = vdwg.mxu0
      %v515 = vpack.c.bf16 %v512, %v509
      %v517 = vunpack.c.l.b16 %v515
      %v518 = vunpack.c.h.b16 %v515
      %v519 = vpack.c.b16 %v517, %v517
      %v520 = vpack.c.b16 %v518, %v518
      %vm523 = vcmask 125952
      %524 = vst.msk [vmem:[%s282] sm:$0xf] %vm523, %v519
      %525 = vst.msk [vmem:[%s282 + $0x4] sm:$0xf] %vm523, %v520
      %v526 = vmul.f32 %v509, %v509
      %v527 = vmul.f32 %v512, %v512
      %v528 = vsel %vm291, %v526, 0.0
      %529 = vadd.xlane.f32.xlu0 %v528
      %v530 = vpop.xlane.xlu0 %529
      %v531 = vsel %vm291, %v527, 0.0
      %532 = vadd.xlane.f32.xlu0 %v531
      %v533 = vpop.xlane.xlu0 %532
      %v534 = vadd.f32 %v530, %v533
      %vm535 = vcmask 7168
      %536 = vst.msk [vmem:[%s286] sm:$0xff] %vm535, %v534
      %p537 = scmp.lt.s32.totalorder %s19, 1
      %s538 = scalar_select %p537, %s19, 1
      %s539 = smul.addr %s538, 2
      %s540 = smul.addr %s539, 4
      %s541 = scalar_lea.vmem %s6, %s540
      %p542 = scmp.lt.s32.totalorder %s19, 1
      %s543 = scalar_select %p542, %s19, 1
      %s544 = smul.addr %s543, 8
      %s545 = scalar_lea.vmem %s7, %s544
      // Predicated region
      $region45: #{tslanet_layer.2} parent=43 // pred_check
        %p546 = pneg %p168
      $region46: #{tslanet_layer.2} parent=43 // pred_check_branch
        %548 = sbr.rel (%p546) target = $region48
      $region47: #{tslanet_layer.2} parent=43 // pred_region
        _
      $region48: #{tslanet_layer.2} parent=43 // pred_fallthru
        _
      // Predicated region
      $region49: #{tslanet_layer.2} parent=43 // pred_check
        %p549 = pneg %p194
      $region50: #{tslanet_layer.2} parent=43 // pred_check_branch
        %551 = sbr.rel (%p549) target = $region52
      $region51: #{tslanet_layer.2} parent=43 // pred_region
        _
      $region52: #{tslanet_layer.2} parent=43 // pred_fallthru
        _
    $region44: #{tslanet_layer.2} parent=5 // pred_fallthru
      _
    %p552 = scmp.le.s32.totalorder 2, %s14
    // Predicated region
    $region53: #{tslanet_layer.2} parent=5 // pred_check
      %p553 = pneg %p552
    $region54: #{tslanet_layer.2} parent=5 // pred_check_branch
      %555 = sbr.rel (%p553) target = $region56
    $region55: #{tslanet_layer.2} parent=5 // pred_region
      %s556 = ssub.s32 %s14, 2
      // Predicated region
      $region57: #{tslanet_layer.2} parent=55 // pred_check
        %p557 = pneg %p174
      $region58: #{tslanet_layer.2} parent=55 // pred_check_branch
        %559 = sbr.rel (%p557) target = $region60
      $region59: #{tslanet_layer.2} parent=55 // pred_region
        %p560 = scmp.lt.s32.totalorder %s20, 1
        %s561 = scalar_select %p560, %s20, 1
        %s562 = smul.addr %s561, 2
        %s563 = smul.addr %s562, 4
        %s564 = scalar_lea.vmem %s6, %s563
      $region60: #{tslanet_layer.2} parent=55 // pred_fallthru
        _
      // Predicated region
      $region61: #{tslanet_layer.2} parent=55 // pred_check
        %p565 = pneg %p200
      $region62: #{tslanet_layer.2} parent=55 // pred_check_branch
        %567 = sbr.rel (%p565) target = $region64
      $region63: #{tslanet_layer.2} parent=55 // pred_region
        %p568 = scmp.lt.s32.totalorder %s20, 1
        %s569 = scalar_select %p568, %s20, 1
        %s570 = smul.addr %s569, 8
        %s571 = scalar_lea.vmem %s7, %s570
      $region64: #{tslanet_layer.2} parent=55 // pred_fallthru
        _
    $region56: #{tslanet_layer.2} parent=5 // pred_fallthru
      _
  $region6: #{tslanet_layer.2} parent=0 // loop_footer
    %s18 = sadd.s32 1, %s14
  $region7: #{tslanet_layer.2} parent=0 // loop_footer_branch
    %13 = sbr.rel target = $region3
  $region8: #{tslanet_layer.2} parent=0 // loop_exit
    _

// kernel: tslanet_layer.3
$region0: #{tslanet_layer.3}
  #allocation0 [shape = 'u32[]', space=smem, size = 0x4, offset = 0x4, fixed_abs, tag = 'smem constant byte address 0x4 - core index']
  #allocation1 [shape = 'u32[144,128]{1,0:T(1,128)}', space=vmem, size = 0x12000, scoped, tag = 'internal scratch']
  #allocation2 [shape = 'f32[1]{0:T(128)S(6)}', space=smem, size = 0x200, scoped, tag = 'scoped memory for tslanet_layer.3']
  %s0 = inlined_call_operand.<no memory space> [shape: f32[1], index: 0, kind: input, shape index: {}]
  %s1 = inlined_call_operand.vmem [shape: f32[2,8,16], index: 1, kind: input, shape index: {}]
  %s2 = inlined_call_operand.vmem [shape: bf16[2,16,16], index: 2, kind: input, shape index: {}]
  %s3 = inlined_call_operand.vmem [shape: f32[2,8,1], index: 3, kind: input, shape index: {}]
  %s4 = inlined_call_operand.vmem [shape: f32[1,16], index: 4, kind: input, shape index: {}]
  %s5 = inlined_call_operand.vmem [shape: f32[1,16], index: 5, kind: input, shape index: {}]
  %s6 = inlined_call_operand.vmem [shape: f32[1,16], index: 6, kind: input, shape index: {}]
  %s7 = inlined_call_operand.vmem [shape: f32[1,16], index: 7, kind: input, shape index: {}]
  %s8 = inlined_call_operand.vmem [shape: f32[1,16], index: 8, kind: input, shape index: {}]
  %s9 = inlined_call_operand.vmem [shape: bf16[8,16], index: 9, kind: input, shape index: {}]
  %s10 = inlined_call_operand.vmem [shape: f32[16,16], index: 10, kind: input, shape index: {}]
  %s11 = inlined_call_operand.vmem [shape: f32[1,16], index: 11, kind: input, shape index: {}]
  %s12 = inlined_call_operand.vmem [shape: f32[1,16], index: 12, kind: input, shape index: {}]
  %s13 = inlined_call_operand.vmem [shape: bf16[16,48], index: 13, kind: input, shape index: {}]
  %s14 = inlined_call_operand.vmem [shape: f32[1,48], index: 14, kind: input, shape index: {}]
  %s15 = inlined_call_operand.vmem [shape: bf16[3,16,48], index: 15, kind: input, shape index: {}]
  %s16 = inlined_call_operand.vmem [shape: f32[1,48], index: 16, kind: input, shape index: {}]
  %s17 = inlined_call_operand.vmem [shape: bf16[48,16], index: 17, kind: input, shape index: {}]
  %s18 = inlined_call_operand.vmem [shape: f32[1,16], index: 18, kind: input, shape index: {}]
  %s19 = inlined_call_operand.hbm [shape: f32[2,8,16], index: 19, kind: output, shape index: {}]
  %s20 = sld [smem:[#allocation0]]
  $region109: #{tslanet_layer.3} parent=0
    _
  %s22 = ssub.s32 1, %s20
  %s23 = scalar_select 0, %s22, %s20
  %24 = sst [smem:[#allocation2]] %s0
  $region1: #{tslanet_layer.3} parent=0
    #allocation3 [shape = 'u8[8192]{0}', space=vmem, size = 0x2000, scoped, tag = 'output window, operand 0']
    #allocation4 [shape = 's32[2]{0}', space=sflag, size = 0x8, scoped, tag = 'scoped memory for tslanet_layer.3']
    %25 = vsyncpa [#allocation4], 0
    %s26 = scalar_lea.sflag [#allocation4], 1
    %27 = vsyncpa %s26, 0
    loop: start=0, step=1, limit=4
    $region2: #{tslanet_layer.3} parent=1 // loop_pre_header
      _
    $region3: #{tslanet_layer.3} parent=1 // loop_header
      %s29 = sphi 0, %s33
      %p30 = scmp.ge.s32.totalorder %s29, 4
      %s37 = sphi 0, %s37
      %s39 = sphi 0, %s37
      %s40 = sphi 0, %s39
      %s54 = sphi 0, %s40
      %s60 = sphi 0, %s62
      %s63 = sphi 0, %s60
      %s64 = sphi 0, %s63
      %s80 = sphi 0, %s64
      %s86 = sphi 0, %s88
      %s89 = sphi 0, %s86
      %s90 = sphi 0, %s89
      %s106 = sphi 0, %s90
      %s112 = sphi 0, %s114
      %s115 = sphi 0, %s112
      %s116 = sphi 0, %s115
      %s132 = sphi 0, %s116
      %s136 = sphi 0, %s136
      %s138 = sphi 0, %s136
      %s139 = sphi 0, %s138
      %s153 = sphi 0, %s139
      %s157 = sphi 0, %s157
      %s159 = sphi 0, %s157
      %s160 = sphi 0, %s159
      %s174 = sphi 0, %s160
      %s178 = sphi 0, %s178
      %s180 = sphi 0, %s178
      %s181 = sphi 0, %s180
      %s195 = sphi 0, %s181
      %s199 = sphi 0, %s199
      %s201 = sphi 0, %s199
      %s202 = sphi 0, %s201
      %s216 = sphi 0, %s202
      %s220 = sphi 0, %s220
      %s222 = sphi 0, %s220
      %s223 = sphi 0, %s222
      %s237 = sphi 0, %s223
      %s241 = sphi 0, %s241
      %s243 = sphi 0, %s241
      %s244 = sphi 0, %s243
      %s258 = sphi 0, %s244
      %s262 = sphi 0, %s262
      %s264 = sphi 0, %s262
      %s265 = sphi 0, %s264
      %s279 = sphi 0, %s265
      %s283 = sphi 0, %s283
      %s285 = sphi 0, %s283
      %s286 = sphi 0, %s285
      %s300 = sphi 0, %s286
      %s304 = sphi 0, %s304
      %s306 = sphi 0, %s304
      %s307 = sphi 0, %s306
      %s321 = sphi 0, %s307
      %s325 = sphi 0, %s325
      %s327 = sphi 0, %s325
      %s328 = sphi 0, %s327
      %s342 = sphi 0, %s328
      %s346 = sphi 0, %s346
      %s348 = sphi 0, %s346
      %s349 = sphi 0, %s348
      %s363 = sphi 0, %s349
      %s367 = sphi 0, %s367
      %s369 = sphi 0, %s367
      %s370 = sphi 0, %s369
      %s384 = sphi 0, %s370
      %s388 = sphi 0, %s388
      %s390 = sphi 0, %s388
      %s391 = sphi 0, %s390
      %s405 = sphi 0, %s391
      %s409 = sphi 0, %s409
      %s411 = sphi 0, %s409
      %s412 = sphi 0, %s411
      %s426 = sphi 0, %s412
      %s430 = sphi 0, %s430
      %s432 = sphi 0, %s430
      %s433 = sphi 0, %s432
      %s447 = sphi 0, %s433
      %s453 = sphi 0, %s455
      %s456 = sphi 0, %s453
      %s457 = sphi 0, %s456
      %s473 = sphi 0, %s457
    $region4: #{tslanet_layer.3} parent=1 // loop_header_branch
      %32 = sbr.rel (%p30) target = $region8
    $region5: #{tslanet_layer.3} parent=1 // loop_body
      %s34 = ssub.s32 %s29, 1
      %s35 = ssub.s32 %s29, 2
      %s36 = sadd.s32 %s29, 1
      %s38 = sadd.s32 %s37, 1
      %p41 = scmp.eq.s32.totalorder %s29, 1
      %p42 = scmp.ne.s32.totalorder %s37, %s39
      %p43 = scmp.eq.s32.totalorder %s29, 0
      %p44 = por %p42, %p43
      %p45 = scmp.ne.s32.totalorder %s37, %s39
      %p46 = scmp.eq.s32.totalorder %s34, 1
      %p47 = por %p45, %p46
      %p48 = scmp.ne.s32.totalorder %s39, %s40
      %p49 = scmp.eq.s32.totalorder %s34, 0
      %p50 = por %p48, %p49
      %p51 = scmp.ne.s32.totalorder %s39, %s40
      %p52 = scmp.eq.s32.totalorder %s35, 1
      %p53 = por %p51, %p52
      %p55 = scmp.ne.s32.totalorder %s40, %s54
      %p56 = scmp.eq.s32.totalorder %s35, 0
      %p57 = por %p55, %p56
      %s58 = ssub.s32 %s29, %s36
      %p59 = scmp.eq.s32.totalorder %s58, 0
      %s61 = sadd.s32 %s60, 1
      %s62 = scalar_select %p59, %s60, %s61
      %p65 = pneg %p59
      %p66 = scmp.eq.s32.totalorder %s29, 1
      %p67 = por %p65, %p66
      %p68 = scmp.ne.s32.totalorder %s60, %s63
      %p69 = scmp.eq.s32.totalorder %s29, 0
      %p70 = por %p68, %p69
      %p71 = scmp.ne.s32.totalorder %s60, %s63
      %p72 = scmp.eq.s32.totalorder %s34, 1
      %p73 = por %p71, %p72
      %p74 = scmp.ne.s32.totalorder %s63, %s64
      %p75 = scmp.eq.s32.totalorder %s34, 0
      %p76 = por %p74, %p75
      %p77 = scmp.ne.s32.totalorder %s63, %s64
      %p78 = scmp.eq.s32.totalorder %s35, 1
      %p79 = por %p77, %p78
      %p81 = scmp.ne.s32.totalorder %s64, %s80
      %p82 = scmp.eq.s32.totalorder %s35, 0
      %p83 = por %p81, %p82
      %s84 = ssub.s32 %s29, %s36
      %p85 = scmp.eq.s32.totalorder %s84, 0
      %s87 = sadd.s32 %s86, 1
      %s88 = scalar_select %p85, %s86, %s87
      %p91 = pneg %p85
      %p92 = scmp.eq.s32.totalorder %s29, 1
      %p93 = por %p91, %p92
      %p94 = scmp.ne.s32.totalorder %s86, %s89
      %p95 = scmp.eq.s32.totalorder %s29, 0
      %p96 = por %p94, %p95
      %p97 = scmp.ne.s32.totalorder %s86, %s89
      %p98 = scmp.eq.s32.totalorder %s34, 1
      %p99 = por %p97, %p98
      %p100 = scmp.ne.s32.totalorder %s89, %s90
      %p101 = scmp.eq.s32.totalorder %s34, 0
      %p102 = por %p100, %p101
      %p103 = scmp.ne.s32.totalorder %s89, %s90
      %p104 = scmp.eq.s32.totalorder %s35, 1
      %p105 = por %p103, %p104
      %p107 = scmp.ne.s32.totalorder %s90, %s106
      %p108 = scmp.eq.s32.totalorder %s35, 0
      %p109 = por %p107, %p108
      %s110 = ssub.s32 %s29, %s36
      %p111 = scmp.eq.s32.totalorder %s110, 0
      %s113 = sadd.s32 %s112, 1
      %s114 = scalar_select %p111, %s112, %s113
      %p117 = pneg %p111
      %p118 = scmp.eq.s32.totalorder %s29, 1
      %p119 = por %p117, %p118
      %p120 = scmp.ne.s32.totalorder %s112, %s115
      %p121 = scmp.eq.s32.totalorder %s29, 0
      %p122 = por %p120, %p121
      %p123 = scmp.ne.s32.totalorder %s112, %s115
      %p124 = scmp.eq.s32.totalorder %s34, 1
      %p125 = por %p123, %p124
      %p126 = scmp.ne.s32.totalorder %s115, %s116
      %p127 = scmp.eq.s32.totalorder %s34, 0
      %p128 = por %p126, %p127
      %p129 = scmp.ne.s32.totalorder %s115, %s116
      %p130 = scmp.eq.s32.totalorder %s35, 1
      %p131 = por %p129, %p130
      %p133 = scmp.ne.s32.totalorder %s116, %s132
      %p134 = scmp.eq.s32.totalorder %s35, 0
      %p135 = por %p133, %p134
      %s137 = sadd.s32 %s136, 1
      %p140 = scmp.eq.s32.totalorder %s29, 1
      %p141 = scmp.ne.s32.totalorder %s136, %s138
      %p142 = scmp.eq.s32.totalorder %s29, 0
      %p143 = por %p141, %p142
      %p144 = scmp.ne.s32.totalorder %s136, %s138
      %p145 = scmp.eq.s32.totalorder %s34, 1
      %p146 = por %p144, %p145
      %p147 = scmp.ne.s32.totalorder %s138, %s139
      %p148 = scmp.eq.s32.totalorder %s34, 0
      %p149 = por %p147, %p148
      %p150 = scmp.ne.s32.totalorder %s138, %s139
      %p151 = scmp.eq.s32.totalorder %s35, 1
      %p152 = por %p150, %p151
      %p154 = scmp.ne.s32.totalorder %s139, %s153
      %p155 = scmp.eq.s32.totalorder %s35, 0
      %p156 = por %p154, %p155
      %s158 = sadd.s32 %s157, 1
      %p161 = scmp.eq.s32.totalorder %s29, 1
      %p162 = scmp.ne.s32.totalorder %s157, %s159
      %p163 = scmp.eq.s32.totalorder %s29, 0
      %p164 = por %p162, %p163
      %p165 = scmp.ne.s32.totalorder %s157, %s159
      %p166 = scmp.eq.s32.totalorder %s34, 1
      %p167 = por %p165, %p166
      %p168 = scmp.ne.s32.totalorder %s159, %s160
      %p169 = scmp.eq.s32.totalorder %s34, 0
      %p170 = por %p168, %p169
      %p171 = scmp.ne.s32.totalorder %s159, %s160
      %p172 = scmp.eq.s32.totalorder %s35, 1
      %p173 = por %p171, %p172
      %p175 = scmp.ne.s32.totalorder %s160, %s174
      %p176 = scmp.eq.s32.totalorder %s35, 0
      %p177 = por %p175, %p176
      %s179 = sadd.s32 %s178, 1
      %p182 = scmp.eq.s32.totalorder %s29, 1
      %p183 = scmp.ne.s32.totalorder %s178, %s180
      %p184 = scmp.eq.s32.totalorder %s29, 0
      %p185 = por %p183, %p184
      %p186 = scmp.ne.s32.totalorder %s178, %s180
      %p187 = scmp.eq.s32.totalorder %s34, 1
      %p188 = por %p186, %p187
      %p189 = scmp.ne.s32.totalorder %s180, %s181
      %p190 = scmp.eq.s32.totalorder %s34, 0
      %p191 = por %p189, %p190
      %p192 = scmp.ne.s32.totalorder %s180, %s181
      %p193 = scmp.eq.s32.totalorder %s35, 1
      %p194 = por %p192, %p193
      %p196 = scmp.ne.s32.totalorder %s181, %s195
      %p197 = scmp.eq.s32.totalorder %s35, 0
      %p198 = por %p196, %p197
      %s200 = sadd.s32 %s199, 1
      %p203 = scmp.eq.s32.totalorder %s29, 1
      %p204 = scmp.ne.s32.totalorder %s199, %s201
      %p205 = scmp.eq.s32.totalorder %s29, 0
      %p206 = por %p204, %p205
      %p207 = scmp.ne.s32.totalorder %s199, %s201
      %p208 = scmp.eq.s32.totalorder %s34, 1
      %p209 = por %p207, %p208
      %p210 = scmp.ne.s32.totalorder %s201, %s202
      %p211 = scmp.eq.s32.totalorder %s34, 0
      %p212 = por %p210, %p211
      %p213 = scmp.ne.s32.totalorder %s201, %s202
      %p214 = scmp.eq.s32.totalorder %s35, 1
      %p215 = por %p213, %p214
      %p217 = scmp.ne.s32.totalorder %s202, %s216
      %p218 = scmp.eq.s32.totalorder %s35, 0
      %p219 = por %p217, %p218
      %s221 = sadd.s32 %s220, 1
      %p224 = scmp.eq.s32.totalorder %s29, 1
      %p225 = scmp.ne.s32.totalorder %s220, %s222
      %p226 = scmp.eq.s32.totalorder %s29, 0
      %p227 = por %p225, %p226
      %p228 = scmp.ne.s32.totalorder %s220, %s222
      %p229 = scmp.eq.s32.totalorder %s34, 1
      %p230 = por %p228, %p229
      %p231 = scmp.ne.s32.totalorder %s222, %s223
      %p232 = scmp.eq.s32.totalorder %s34, 0
      %p233 = por %p231, %p232
      %p234 = scmp.ne.s32.totalorder %s222, %s223
      %p235 = scmp.eq.s32.totalorder %s35, 1
      %p236 = por %p234, %p235
      %p238 = scmp.ne.s32.totalorder %s223, %s237
      %p239 = scmp.eq.s32.totalorder %s35, 0
      %p240 = por %p238, %p239
      %s242 = sadd.s32 %s241, 1
      %p245 = scmp.eq.s32.totalorder %s29, 1
      %p246 = scmp.ne.s32.totalorder %s241, %s243
      %p247 = scmp.eq.s32.totalorder %s29, 0
      %p248 = por %p246, %p247
      %p249 = scmp.ne.s32.totalorder %s241, %s243
      %p250 = scmp.eq.s32.totalorder %s34, 1
      %p251 = por %p249, %p250
      %p252 = scmp.ne.s32.totalorder %s243, %s244
      %p253 = scmp.eq.s32.totalorder %s34, 0
      %p254 = por %p252, %p253
      %p255 = scmp.ne.s32.totalorder %s243, %s244
      %p256 = scmp.eq.s32.totalorder %s35, 1
      %p257 = por %p255, %p256
      %p259 = scmp.ne.s32.totalorder %s244, %s258
      %p260 = scmp.eq.s32.totalorder %s35, 0
      %p261 = por %p259, %p260
      %s263 = sadd.s32 %s262, 1
      %p266 = scmp.eq.s32.totalorder %s29, 1
      %p267 = scmp.ne.s32.totalorder %s262, %s264
      %p268 = scmp.eq.s32.totalorder %s29, 0
      %p269 = por %p267, %p268
      %p270 = scmp.ne.s32.totalorder %s262, %s264
      %p271 = scmp.eq.s32.totalorder %s34, 1
      %p272 = por %p270, %p271
      %p273 = scmp.ne.s32.totalorder %s264, %s265
      %p274 = scmp.eq.s32.totalorder %s34, 0
      %p275 = por %p273, %p274
      %p276 = scmp.ne.s32.totalorder %s264, %s265
      %p277 = scmp.eq.s32.totalorder %s35, 1
      %p278 = por %p276, %p277
      %p280 = scmp.ne.s32.totalorder %s265, %s279
      %p281 = scmp.eq.s32.totalorder %s35, 0
      %p282 = por %p280, %p281
      %s284 = sadd.s32 %s283, 1
      %p287 = scmp.eq.s32.totalorder %s29, 1
      %p288 = scmp.ne.s32.totalorder %s283, %s285
      %p289 = scmp.eq.s32.totalorder %s29, 0
      %p290 = por %p288, %p289
      %p291 = scmp.ne.s32.totalorder %s283, %s285
      %p292 = scmp.eq.s32.totalorder %s34, 1
      %p293 = por %p291, %p292
      %p294 = scmp.ne.s32.totalorder %s285, %s286
      %p295 = scmp.eq.s32.totalorder %s34, 0
      %p296 = por %p294, %p295
      %p297 = scmp.ne.s32.totalorder %s285, %s286
      %p298 = scmp.eq.s32.totalorder %s35, 1
      %p299 = por %p297, %p298
      %p301 = scmp.ne.s32.totalorder %s286, %s300
      %p302 = scmp.eq.s32.totalorder %s35, 0
      %p303 = por %p301, %p302
      %s305 = sadd.s32 %s304, 1
      %p308 = scmp.eq.s32.totalorder %s29, 1
      %p309 = scmp.ne.s32.totalorder %s304, %s306
      %p310 = scmp.eq.s32.totalorder %s29, 0
      %p311 = por %p309, %p310
      %p312 = scmp.ne.s32.totalorder %s304, %s306
      %p313 = scmp.eq.s32.totalorder %s34, 1
      %p314 = por %p312, %p313
      %p315 = scmp.ne.s32.totalorder %s306, %s307
      %p316 = scmp.eq.s32.totalorder %s34, 0
      %p317 = por %p315, %p316
      %p318 = scmp.ne.s32.totalorder %s306, %s307
      %p319 = scmp.eq.s32.totalorder %s35, 1
      %p320 = por %p318, %p319
      %p322 = scmp.ne.s32.totalorder %s307, %s321
      %p323 = scmp.eq.s32.totalorder %s35, 0
      %p324 = por %p322, %p323
      %s326 = sadd.s32 %s325, 1
      %p329 = scmp.eq.s32.totalorder %s29, 1
      %p330 = scmp.ne.s32.totalorder %s325, %s327
      %p331 = scmp.eq.s32.totalorder %s29, 0
      %p332 = por %p330, %p331
      %p333 = scmp.ne.s32.totalorder %s325, %s327
      %p334 = scmp.eq.s32.totalorder %s34, 1
      %p335 = por %p333, %p334
      %p336 = scmp.ne.s32.totalorder %s327, %s328
      %p337 = scmp.eq.s32.totalorder %s34, 0
      %p338 = por %p336, %p337
      %p339 = scmp.ne.s32.totalorder %s327, %s328
      %p340 = scmp.eq.s32.totalorder %s35, 1
      %p341 = por %p339, %p340
      %p343 = scmp.ne.s32.totalorder %s328, %s342
      %p344 = scmp.eq.s32.totalorder %s35, 0
      %p345 = por %p343, %p344
      %s347 = sadd.s32 %s346, 1
      %p350 = scmp.eq.s32.totalorder %s29, 1
      %p351 = scmp.ne.s32.totalorder %s346, %s348
      %p352 = scmp.eq.s32.totalorder %s29, 0
      %p353 = por %p351, %p352
      %p354 = scmp.ne.s32.totalorder %s346, %s348
      %p355 = scmp.eq.s32.totalorder %s34, 1
      %p356 = por %p354, %p355
      %p357 = scmp.ne.s32.totalorder %s348, %s349
      %p358 = scmp.eq.s32.totalorder %s34, 0
      %p359 = por %p357, %p358
      %p360 = scmp.ne.s32.totalorder %s348, %s349
      %p361 = scmp.eq.s32.totalorder %s35, 1
      %p362 = por %p360, %p361
      %p364 = scmp.ne.s32.totalorder %s349, %s363
      %p365 = scmp.eq.s32.totalorder %s35, 0
      %p366 = por %p364, %p365
      %s368 = sadd.s32 %s367, 1
      %p371 = scmp.eq.s32.totalorder %s29, 1
      %p372 = scmp.ne.s32.totalorder %s367, %s369
      %p373 = scmp.eq.s32.totalorder %s29, 0
      %p374 = por %p372, %p373
      %p375 = scmp.ne.s32.totalorder %s367, %s369
      %p376 = scmp.eq.s32.totalorder %s34, 1
      %p377 = por %p375, %p376
      %p378 = scmp.ne.s32.totalorder %s369, %s370
      %p379 = scmp.eq.s32.totalorder %s34, 0
      %p380 = por %p378, %p379
      %p381 = scmp.ne.s32.totalorder %s369, %s370
      %p382 = scmp.eq.s32.totalorder %s35, 1
      %p383 = por %p381, %p382
      %p385 = scmp.ne.s32.totalorder %s370, %s384
      %p386 = scmp.eq.s32.totalorder %s35, 0
      %p387 = por %p385, %p386
      %s389 = sadd.s32 %s388, 1
      %p392 = scmp.eq.s32.totalorder %s29, 1
      %p393 = scmp.ne.s32.totalorder %s388, %s390
      %p394 = scmp.eq.s32.totalorder %s29, 0
      %p395 = por %p393, %p394
      %p396 = scmp.ne.s32.totalorder %s388, %s390
      %p397 = scmp.eq.s32.totalorder %s34, 1
      %p398 = por %p396, %p397
      %p399 = scmp.ne.s32.totalorder %s390, %s391
      %p400 = scmp.eq.s32.totalorder %s34, 0
      %p401 = por %p399, %p400
      %p402 = scmp.ne.s32.totalorder %s390, %s391
      %p403 = scmp.eq.s32.totalorder %s35, 1
      %p404 = por %p402, %p403
      %p406 = scmp.ne.s32.totalorder %s391, %s405
      %p407 = scmp.eq.s32.totalorder %s35, 0
      %p408 = por %p406, %p407
      %s410 = sadd.s32 %s409, 1
      %p413 = scmp.eq.s32.totalorder %s29, 1
      %p414 = scmp.ne.s32.totalorder %s409, %s411
      %p415 = scmp.eq.s32.totalorder %s29, 0
      %p416 = por %p414, %p415
      %p417 = scmp.ne.s32.totalorder %s409, %s411
      %p418 = scmp.eq.s32.totalorder %s34, 1
      %p419 = por %p417, %p418
      %p420 = scmp.ne.s32.totalorder %s411, %s412
      %p421 = scmp.eq.s32.totalorder %s34, 0
      %p422 = por %p420, %p421
      %p423 = scmp.ne.s32.totalorder %s411, %s412
      %p424 = scmp.eq.s32.totalorder %s35, 1
      %p425 = por %p423, %p424
      %p427 = scmp.ne.s32.totalorder %s412, %s426
      %p428 = scmp.eq.s32.totalorder %s35, 0
      %p429 = por %p427, %p428
      %s431 = sadd.s32 %s430, 1
      %p434 = scmp.eq.s32.totalorder %s29, 1
      %p435 = scmp.ne.s32.totalorder %s430, %s432
      %p436 = scmp.eq.s32.totalorder %s29, 0
      %p437 = por %p435, %p436
      %p438 = scmp.ne.s32.totalorder %s430, %s432
      %p439 = scmp.eq.s32.totalorder %s34, 1
      %p440 = por %p438, %p439
      %p441 = scmp.ne.s32.totalorder %s432, %s433
      %p442 = scmp.eq.s32.totalorder %s34, 0
      %p443 = por %p441, %p442
      %p444 = scmp.ne.s32.totalorder %s432, %s433
      %p445 = scmp.eq.s32.totalorder %s35, 1
      %p446 = por %p444, %p445
      %p448 = scmp.ne.s32.totalorder %s433, %s447
      %p449 = scmp.eq.s32.totalorder %s35, 0
      %p450 = por %p448, %p449
      %s451 = ssub.s32 %s29, %s36
      %p452 = scmp.eq.s32.totalorder %s451, 0
      %s454 = sadd.s32 %s453, 1
      %s455 = scalar_select %p452, %s453, %s454
      %p458 = pneg %p452
      %p459 = scmp.eq.s32.totalorder %s29, 1
      %p460 = por %p458, %p459
      %p461 = scmp.ne.s32.totalorder %s453, %s456
      %p462 = scmp.eq.s32.totalorder %s29, 0
      %p463 = por %p461, %p462
      %p464 = scmp.ne.s32.totalorder %s453, %s456
      %p465 = scmp.eq.s32.totalorder %s34, 1
      %p466 = por %p464, %p465
      %p467 = scmp.ne.s32.totalorder %s456, %s457
      %p468 = scmp.eq.s32.totalorder %s34, 0
      %p469 = por %p467, %p468
      %p470 = scmp.ne.s32.totalorder %s456, %s457
      %p471 = scmp.eq.s32.totalorder %s35, 1
      %p472 = por %p470, %p471
      %p474 = scmp.ne.s32.totalorder %s457, %s473
      %p475 = scmp.eq.s32.totalorder %s35, 0
      %p476 = por %p474, %p475
      %p477 = scmp.le.s32.totalorder 1, %s29
      %p478 = scmp.lt.s32.totalorder %s29, 3
      %p479 = pnand %p477, %p478
      %p480 = pneg %p479
      // Predicated region
      $region9: #{tslanet_layer.3} parent=5 // pred_check
        _
      $region10: #{tslanet_layer.3} parent=5 // pred_check_branch
        %482 = sbr.rel (%p479) target = $region12
      $region11: #{tslanet_layer.3} parent=5 // pred_region
        %s483 = ssub.s32 %s29, 1
        // Predicated region
        $region13: #{tslanet_layer.3} parent=11 // pred_check
          %p484 = pneg %p50
        $region14: #{tslanet_layer.3} parent=11 // pred_check_branch
          %486 = sbr.rel (%p484) target = $region16
        $region15: #{tslanet_layer.3} parent=11 // pred_region
          _
        $region16: #{tslanet_layer.3} parent=11 // pred_fallthru
          _
        // Predicated region
        $region17: #{tslanet_layer.3} parent=11 // pred_check
          %p487 = pneg %p149
        $region18: #{tslanet_layer.3} parent=11 // pred_check_branch
          %489 = sbr.rel (%p487) target = $region20
        $region19: #{tslanet_layer.3} parent=11 // pred_region
          _
        $region20: #{tslanet_layer.3} parent=11 // pred_fallthru
          _
        // Predicated region
        $region21: #{tslanet_layer.3} parent=11 // pred_check
          %p490 = pneg %p170
        $region22: #{tslanet_layer.3} parent=11 // pred_check_branch
          %492 = sbr.rel (%p490) target = $region24
        $region23: #{tslanet_layer.3} parent=11 // pred_region
          _
        $region24: #{tslanet_layer.3} parent=11 // pred_fallthru
          _
        // Predicated region
        $region25: #{tslanet_layer.3} parent=11 // pred_check
          %p493 = pneg %p191
        $region26: #{tslanet_layer.3} parent=11 // pred_check_branch
          %495 = sbr.rel (%p493) target = $region28
        $region27: #{tslanet_layer.3} parent=11 // pred_region
          _
        $region28: #{tslanet_layer.3} parent=11 // pred_fallthru
          _
        // Predicated region
        $region29: #{tslanet_layer.3} parent=11 // pred_check
          %p496 = pneg %p212
        $region30: #{tslanet_layer.3} parent=11 // pred_check_branch
          %498 = sbr.rel (%p496) target = $region32
        $region31: #{tslanet_layer.3} parent=11 // pred_region
          _
        $region32: #{tslanet_layer.3} parent=11 // pred_fallthru
          _
        // Predicated region
        $region33: #{tslanet_layer.3} parent=11 // pred_check
          %p499 = pneg %p233
        $region34: #{tslanet_layer.3} parent=11 // pred_check_branch
          %501 = sbr.rel (%p499) target = $region36
        $region35: #{tslanet_layer.3} parent=11 // pred_region
          _
        $region36: #{tslanet_layer.3} parent=11 // pred_fallthru
          _
        // Predicated region
        $region37: #{tslanet_layer.3} parent=11 // pred_check
          %p502 = pneg %p254
        $region38: #{tslanet_layer.3} parent=11 // pred_check_branch
          %504 = sbr.rel (%p502) target = $region40
        $region39: #{tslanet_layer.3} parent=11 // pred_region
          _
        $region40: #{tslanet_layer.3} parent=11 // pred_fallthru
          _
        // Predicated region
        $region41: #{tslanet_layer.3} parent=11 // pred_check
          %p505 = pneg %p275
        $region42: #{tslanet_layer.3} parent=11 // pred_check_branch
          %507 = sbr.rel (%p505) target = $region44
        $region43: #{tslanet_layer.3} parent=11 // pred_region
          _
        $region44: #{tslanet_layer.3} parent=11 // pred_fallthru
          _
        // Predicated region
        $region45: #{tslanet_layer.3} parent=11 // pred_check
          %p508 = pneg %p296
        $region46: #{tslanet_layer.3} parent=11 // pred_check_branch
          %510 = sbr.rel (%p508) target = $region48
        $region47: #{tslanet_layer.3} parent=11 // pred_region
          _
        $region48: #{tslanet_layer.3} parent=11 // pred_fallthru
          _
        // Predicated region
        $region49: #{tslanet_layer.3} parent=11 // pred_check
          %p511 = pneg %p317
        $region50: #{tslanet_layer.3} parent=11 // pred_check_branch
          %513 = sbr.rel (%p511) target = $region52
        $region51: #{tslanet_layer.3} parent=11 // pred_region
          _
        $region52: #{tslanet_layer.3} parent=11 // pred_fallthru
          _
        // Predicated region
        $region53: #{tslanet_layer.3} parent=11 // pred_check
          %p514 = pneg %p338
        $region54: #{tslanet_layer.3} parent=11 // pred_check_branch
          %516 = sbr.rel (%p514) target = $region56
        $region55: #{tslanet_layer.3} parent=11 // pred_region
          _
        $region56: #{tslanet_layer.3} parent=11 // pred_fallthru
          _
        // Predicated region
        $region57: #{tslanet_layer.3} parent=11 // pred_check
          %p517 = pneg %p359
        $region58: #{tslanet_layer.3} parent=11 // pred_check_branch
          %519 = sbr.rel (%p517) target = $region60
        $region59: #{tslanet_layer.3} parent=11 // pred_region
          _
        $region60: #{tslanet_layer.3} parent=11 // pred_fallthru
          _
        // Predicated region
        $region61: #{tslanet_layer.3} parent=11 // pred_check
          %p520 = pneg %p380
        $region62: #{tslanet_layer.3} parent=11 // pred_check_branch
          %522 = sbr.rel (%p520) target = $region64
        $region63: #{tslanet_layer.3} parent=11 // pred_region
          _
        $region64: #{tslanet_layer.3} parent=11 // pred_fallthru
          _
        // Predicated region
        $region65: #{tslanet_layer.3} parent=11 // pred_check
          %p523 = pneg %p401
        $region66: #{tslanet_layer.3} parent=11 // pred_check_branch
          %525 = sbr.rel (%p523) target = $region68
        $region67: #{tslanet_layer.3} parent=11 // pred_region
          _
        $region68: #{tslanet_layer.3} parent=11 // pred_fallthru
          _
        // Predicated region
        $region69: #{tslanet_layer.3} parent=11 // pred_check
          %p526 = pneg %p422
        $region70: #{tslanet_layer.3} parent=11 // pred_check_branch
          %528 = sbr.rel (%p526) target = $region72
        $region71: #{tslanet_layer.3} parent=11 // pred_region
          _
        $region72: #{tslanet_layer.3} parent=11 // pred_fallthru
          _
        // Predicated region
        $region73: #{tslanet_layer.3} parent=11 // pred_check
          %p529 = pneg %p443
        $region74: #{tslanet_layer.3} parent=11 // pred_check_branch
          %531 = sbr.rel (%p529) target = $region76
        $region75: #{tslanet_layer.3} parent=11 // pred_region
          _
        $region76: #{tslanet_layer.3} parent=11 // pred_fallthru
          _
      $region12: #{tslanet_layer.3} parent=5 // pred_fallthru
        _
      %p532 = scmp.lt.s32.totalorder %s29, 2
      // Predicated region
      $region77: #{tslanet_layer.3} parent=5 // pred_check
        %p533 = pneg %p532
      $region78: #{tslanet_layer.3} parent=5 // pred_check_branch
        %535 = sbr.rel (%p533) target = $region80
      $region79: #{tslanet_layer.3} parent=5 // pred_region
        // Predicated region
        $region81: #{tslanet_layer.3} parent=79 // pred_check
          %p536 = pneg %p70
        $region82: #{tslanet_layer.3} parent=79 // pred_check_branch
          %538 = sbr.rel (%p536) target = $region84
        $region83: #{tslanet_layer.3} parent=79 // pred_region
          %p539 = scmp.lt.s32.totalorder %s29, 1
          %s540 = scalar_select %p539, %s29, 1
          %s541 = smul.addr %s540, 8
          %s542 = scalar_lea.vmem %s1, %s541
        $region84: #{tslanet_layer.3} parent=79 // pred_fallthru
          _
        // Predicated region
        $region85: #{tslanet_layer.3} parent=79 // pred_check
          %p543 = pneg %p96
        $region86: #{tslanet_layer.3} parent=79 // pred_check_branch
          %545 = sbr.rel (%p543) target = $region88
        $region87: #{tslanet_layer.3} parent=79 // pred_region
          %p546 = scmp.lt.s32.totalorder %s29, 1
          %s547 = scalar_select %p546, %s29, 1
          %s548 = smul.addr %s547, 2
          %s549 = smul.addr %s548, 4
          %s550 = scalar_lea.vmem %s2, %s549
        $region88: #{tslanet_layer.3} parent=79 // pred_fallthru
          _
        // Predicated region
        $region89: #{tslanet_layer.3} parent=79 // pred_check
          %p551 = pneg %p122
        $region90: #{tslanet_layer.3} parent=79 // pred_check_branch
          %553 = sbr.rel (%p551) target = $region92
        $region91: #{tslanet_layer.3} parent=79 // pred_region
          %p554 = scmp.lt.s32.totalorder %s29, 1
          %s555 = scalar_select %p554, %s29, 1
          %s556 = smul.addr %s555, 8
          %s557 = scalar_lea.vmem %s3, %s556
        $region92: #{tslanet_layer.3} parent=79 // pred_fallthru
          _
      $region80: #{tslanet_layer.3} parent=5 // pred_fallthru
        _
      %p558 = scmp.le.s32.totalorder 1, %s29
      %p559 = scmp.lt.s32.totalorder %s29, 3
      %p560 = pnand %p558, %p559
      %p561 = pneg %p560
      // Predicated region
      $region93: #{tslanet_layer.3} parent=5 // pred_check
        _
      $region94: #{tslanet_layer.3} parent=5 // pred_check_branch
        %563 = sbr.rel (%p560) target = $region96
      $region95: #{tslanet_layer.3} parent=5 // pred_region
        %s564 = ssub.s32 %s29, 1
        %p565 = pneg %p50
        %p566 = pneg %p47
        %p567 = scmp.lt.s32.totalorder %s34, 1
        %s568 = scalar_select %p567, %s34, 1
        %s569 = smul.addr %s568, 8
        %s570 = scalar_lea.vmem %s1, %s569
        %p571 = pneg %p76
        %p572 = pneg %p73
        %p573 = scmp.lt.s32.totalorder %s34, 1
        %s574 = scalar_select %p573, %s34, 1
        %s575 = smul.addr %s574, 2
        %s576 = smul.addr %s575, 4
        %s577 = scalar_lea.vmem %s2, %s576
        %p578 = pneg %p102
        %p579 = pneg %p99
        %p580 = scmp.lt.s32.totalorder %s34, 1
        %s581 = scalar_select %p580, %s34, 1
        %s582 = smul.addr %s581, 8
        %s583 = scalar_lea.vmem %s3, %s582
        %p584 = pneg %p128
        %p585 = pneg %p125
        %p586 = pneg %p149
        %p587 = pneg %p146
        %p588 = pneg %p170
        %p589 = pneg %p167
        %p590 = pneg %p191
        %p591 = pneg %p188
        %p592 = pneg %p212
        %p593 = pneg %p209
        %p594 = pneg %p233
        %p595 = pneg %p230
        %p596 = pneg %p254
        %p597 = pneg %p251
        %p598 = pneg %p275
        %p599 = pneg %p272
        %p600 = pneg %p296
        %p601 = pneg %p293
        %p602 = pneg %p317
        %p603 = pneg %p314
        %p604 = pneg %p338
        %p605 = pneg %p335
        %p606 = pneg %p359
        %p607 = pneg %p356
        %p608 = pneg %p380
        %p609 = pneg %p377
        %p610 = pneg %p401
        %p611 = pneg %p398
        %p612 = pneg %p422
        %p613 = pneg %p419
        %p614 = pneg %p443
        %p615 = pneg %p440
        %p616 = pneg %p469
        %p617 = pneg %p466
        %s618 = sand.u32 %s456, 1
        %s619 = scalar_lea.sflag [#allocation4], %s618
        %s620 = sand.u32 %s456, 1
        %s621 = smul.addr %s620, 8
        %s622 = scalar_lea.vmem [#allocation3], %s621
        %p623 = scmp.lt.s32.totalorder %s34, 1
        %s624 = scalar_select %p623, %s34, 1
        %s625 = smul.addr %s624, 8
        %s626 = scalar_lea.vmem %s1, %s625
        %p627 = scmp.lt.s32.totalorder %s34, 1
        %s628 = scalar_select %p627, %s34, 1
        %s629 = smul.addr %s628, 2
        %s630 = smul.addr %s629, 4
        %s631 = scalar_lea.vmem %s2, %s630
        %p632 = scmp.lt.s32.totalorder %s34, 1
        %s633 = scalar_select %p632, %s34, 1
        %s634 = smul.addr %s633, 8
        %s635 = scalar_lea.vmem %s3, %s634
        %v637 = vld [vmem:[%s631] sm:$0xf]
        %v638 = vld [vmem:[%s631 + $0x4] sm:$0xf]
        %v639 = vunpack.c.l.bf16 %v637
        %v640 = vunpack.c.l.bf16 %v638
        %s641 = sld [smem:[#allocation2]]
        %v642 = vld [vmem:[%s635] sm:$0xff]
        %v643 = vstv %s641
        %vm644 = vcmp.gt.f32.partialorder %v642, %v643
        %v645 = vsel %vm644, 1, 0
        %v646 = vcvt.s32.f32 %v645
        %648 = vset.pattern.permute.xlu0 0
        %649 = vperm.xlu0 %648, %v646
        %v650 = vpop.permute.xlu0 %649
        %v652 = vld [vmem:[%s5] sm:$0x1]
        %v653 = vld [vmem:[%s7] sm:$0x1]
        %v655 = vlaneseq
        %v656 = vshrl.u32 %v655, 7
        %v657 = vsub.s32 0, %v656
        %v658 = vrot.slane %v653, %v657
        %v660 = vmul.f32 %v650, %v658
        %v662 = vlaneseq
        %v663 = vshrl.u32 %v662, 7
        %v664 = vsub.s32 0, %v663
        %v665 = vrot.slane %v652, %v664
        %v667 = vadd.f32 %v665, %v660
        %v668 = vld [vmem:[%s6] sm:$0x1]
        %v669 = vld [vmem:[%s8] sm:$0x1]
        %v671 = vlaneseq
        %v672 = vshrl.u32 %v671, 7
        %v673 = vsub.s32 0, %v672
        %v674 = vrot.slane %v669, %v673
        %v676 = vmul.f32 %v650, %v674
        %v678 = vlaneseq
        %v679 = vshrl.u32 %v678, 7
        %v680 = vsub.s32 0, %v679
        %v681 = vrot.slane %v668, %v680
        %v683 = vadd.f32 %v681, %v676
        %v684 = vmul.f32 %v639, %v667
        %v685 = vmul.f32 %v640, %v683
        %v686 = vsub.f32 %v684, %v685
        %v687 = vmul.f32 %v639, %v683
        %v688 = vmul.f32 %v640, %v667
        %v689 = vadd.f32 %v687, %v688
        %v690 = vpack.c.bf16 %v689, %v686
        %v691 = vld [vmem:[%s9] sm:$0xf]
        %vm692 = vcmask 130048
        %v694 = vsel %vm692, %v691, 0
        %696 = vmatprep.subr.bf16.mxu0 0
        %697 = vmatpush1.bf16.msra.mxu0 %v690
        %698 = vmatprep.subr.bf16.mxu0 0
        %699 = vmatpush1.bf16.msra.mxu0 0
        %700 = vmatprep.subr.bf16.mxu0 0
        %701 = vmatpush1.bf16.msra.mxu0 0
        %702 = vmatprep.subr.bf16.mxu0 0
        %703 = vmatpush1.bf16.msra.mxu0 0
        %704 = vmatprep.subr.bf16.mxu0 0
        %705 = vmatpush1.bf16.msra.mxu0 0
        %706 = vmatprep.subr.bf16.mxu0 0
        %707 = vmatpush1.bf16.msra.mxu0 0
        %708 = vmatprep.subr.bf16.mxu0 0
        %709 = vmatpush1.bf16.msra.mxu0 0
        %710 = vmatprep.subr.bf16.mxu0 0
        %711 = vmatpush1.bf16.msra.mxu0 0
        %712 = vmatprep.subr.bf16.mxu0 0
        %713 = vmatpush1.bf16.msra.mxu0 0
        %714 = vmatprep.subr.bf16.mxu0 0
        %715 = vmatpush1.bf16.msra.mxu0 0
        %716 = vmatprep.subr.bf16.mxu0 0
        %717 = vmatpush1.bf16.msra.mxu0 0
        %718 = vmatprep.subr.bf16.mxu0 0
        %719 = vmatpush1.bf16.msra.mxu0 0
        %720 = vmatprep.subr.bf16.mxu0 0
        %721 = vmatpush1.bf16.msra.mxu0 0
        %722 = vmatprep.subr.bf16.mxu0 0
        %723 = vmatpush1.bf16.msra.mxu0 0
        %724 = vmatprep.subr.bf16.mxu0 0
        %725 = vmatpush1.bf16.msra.mxu0 0
        %726 = vmatprep.subr.bf16.mxu0 0
        %727 = vmatpush1.bf16.msra.mxu0 0
        %728 = vmatprep.mubr.bf16.mxu0 0
        %729 = vmatmul.mubr.bf16.gmra.mrb[0].mxu0 %v694
        %v730 = vpop.f32.mrb[0].mxu0
        %v731 = vadd.f32 0.0, %v730
        %v732 = vpop.f32.mrb[0].mxu0
        %v733 = vpop.f32.mrb[0].mxu0
        %v734 = vpop.f32.mrb[0].mxu0
        %735 = vdwg.mxu0
        %v736 = vld [vmem:[%s10] sm:$0xff]
        %v737 = vld [vmem:[%s10 + $0x8] sm:$0xff]
        %v739 = vsel %vm692, %v731, 0
        %741 = vmatprep.subr.mxu0 0.0
        %742 = vmatpush1.msra.mxu0 %v736
        %743 = vmatprep.subr.mxu0 0.0
        %744 = vmatpush1.msra.mxu0 %v737
        %745 = vmatprep.subr.mxu0 0.0
        %746 = vmatpush1.msra.mxu0 0.0
        %747 = vmatprep.subr.mxu0 0.0
        %748 = vmatpush1.msra.mxu0 0.0
        %749 = vmatprep.subr.mxu0 0.0
        %750 = vmatpush1.msra.mxu0 0.0
        %751 = vmatprep.subr.mxu0 0.0
        %752 = vmatpush1.msra.mxu0 0.0
        %753 = vmatprep.subr.mxu0 0.0
        %754 = vmatpush1.msra.mxu0 0.0
        %755 = vmatprep.subr.mxu0 0.0
        %756 = vmatpush1.msra.mxu0 0.0
        %757 = vmatprep.subr.mxu0 0.0
        %758 = vmatpush1.msra.mxu0 0.0
        %759 = vmatprep.subr.mxu0 0.0
        %760 = vmatpush1.msra.mxu0 0.0
        %761 = vmatprep.subr.mxu0 0.0
        %762 = vmatpush1.msra.mxu0 0.0
        %763 = vmatprep.subr.mxu0 0.0
        %764 = vmatpush1.msra.mxu0 0.0
        %765 = vmatprep.subr.mxu0 0.0
        %766 = vmatpush1.msra.mxu0 0.0
        %767 = vmatprep.subr.mxu0 0.0
        %768 = vmatpush1.msra.mxu0 0.0
        %769 = vmatprep.subr.mxu0 0.0
        %770 = vmatpush1.msra.mxu0 0.0
        %771 = vmatprep.subr.mxu0 0.0
        %772 = vmatpush1.msra.mxu0 0.0
        %773 = vmatprep.subr.mxu0 0.0
        %774 = vmatpush1.msra.mxu0 0.0
        %775 = vmatprep.subr.mxu0 0.0
        %776 = vmatpush1.msra.mxu0 0.0
        %777 = vmatprep.subr.mxu0 0.0
        %778 = vmatpush1.msra.mxu0 0.0
        %779 = vmatprep.subr.mxu0 0.0
        %780 = vmatpush1.msra.mxu0 0.0
        %781 = vmatprep.subr.mxu0 0.0
        %782 = vmatpush1.msra.mxu0 0.0
        %783 = vmatprep.subr.mxu0 0.0
        %784 = vmatpush1.msra.mxu0 0.0
        %785 = vmatprep.subr.mxu0 0.0
        %786 = vmatpush1.msra.mxu0 0.0
        %787 = vmatprep.subr.mxu0 0.0
        %788 = vmatpush1.msra.mxu0 0.0
        %789 = vmatprep.subr.mxu0 0.0
        %790 = vmatpush1.msra.mxu0 0.0
        %791 = vmatprep.subr.mxu0 0.0
        %792 = vmatpush1.msra.mxu0 0.0
        %793 = vmatprep.subr.mxu0 0.0
        %794 = vmatpush1.msra.mxu0 0.0
        %795 = vmatprep.subr.mxu0 0.0
        %796 = vmatpush1.msra.mxu0 0.0
        %797 = vmatprep.subr.mxu0 0.0
        %798 = vmatpush1.msra.mxu0 0.0
        %799 = vmatprep.subr.mxu0 0.0
        %800 = vmatpush1.msra.mxu0 0.0
        %801 = vmatprep.subr.mxu0 0.0
        %802 = vmatpush1.msra.mxu0 0.0
        %803 = vmatprep.subr.mxu0 0.0
        %804 = vmatpush1.msra.mxu0 0.0
        %805 = vmatprep.mubr.f32.mxu0 0.0
        %806 = vmatmul.mubr.f32.gmra.mrb[0].mxu0 %v739
        %v807 = vpop.f32.mrb[0].mxu0
        %v808 = vadd.f32 0.0, %v807
        %v809 = vpop.f32.mrb[0].mxu0
        %810 = vdwg.mxu0
        %v811 = vsub.f32 %v731, %v808
        %v812 = vmul.f32 %v811, %v811
        %v814 = vsel %vm692, %v812, 0
        %816 = vmatprep.subr.mxu0 0.0
        %817 = vmatpush1.msra.mxu0 %v736
        %818 = vmatprep.subr.mxu0 0.0
        %819 = vmatpush1.msra.mxu0 %v737
        %820 = vmatprep.subr.mxu0 0.0
        %821 = vmatpush1.msra.mxu0 0.0
        %822 = vmatprep.subr.mxu0 0.0
        %823 = vmatpush1.msra.mxu0 0.0
        %824 = vmatprep.subr.mxu0 0.0
        %825 = vmatpush1.msra.mxu0 0.0
        %826 = vmatprep.subr.mxu0 0.0
        %827 = vmatpush1.msra.mxu0 0.0
        %828 = vmatprep.subr.mxu0 0.0
        %829 = vmatpush1.msra.mxu0 0.0
        %830 = vmatprep.subr.mxu0 0.0
        %831 = vmatpush1.msra.mxu0 0.0
        %832 = vmatprep.subr.mxu0 0.0
        %833 = vmatpush1.msra.mxu0 0.0
        %834 = vmatprep.subr.mxu0 0.0
        %835 = vmatpush1.msra.mxu0 0.0
        %836 = vmatprep.subr.mxu0 0.0
        %837 = vmatpush1.msra.mxu0 0.0
        %838 = vmatprep.subr.mxu0 0.0
        %839 = vmatpush1.msra.mxu0 0.0
        %840 = vmatprep.subr.mxu0 0.0
        %841 = vmatpush1.msra.mxu0 0.0
        %842 = vmatprep.subr.mxu0 0.0
        %843 = vmatpush1.msra.mxu0 0.0
        %844 = vmatprep.subr.mxu0 0.0
        %845 = vmatpush1.msra.mxu0 0.0
        %846 = vmatprep.subr.mxu0 0.0
        %847 = vmatpush1.msra.mxu0 0.0
        %848 = vmatprep.subr.mxu0 0.0
        %849 = vmatpush1.msra.mxu0 0.0
        %850 = vmatprep.subr.mxu0 0.0
        %851 = vmatpush1.msra.mxu0 0.0
        %852 = vmatprep.subr.mxu0 0.0
        %853 = vmatpush1.msra.mxu0 0.0
        %854 = vmatprep.subr.mxu0 0.0
        %855 = vmatpush1.msra.mxu0 0.0
        %856 = vmatprep.subr.mxu0 0.0
        %857 = vmatpush1.msra.mxu0 0.0
        %858 = vmatprep.subr.mxu0 0.0
        %859 = vmatpush1.msra.mxu0 0.0
        %860 = vmatprep.subr.mxu0 0.0
        %861 = vmatpush1.msra.mxu0 0.0
        %862 = vmatprep.subr.mxu0 0.0
        %863 = vmatpush1.msra.mxu0 0.0
        %864 = vmatprep.subr.mxu0 0.0
        %865 = vmatpush1.msra.mxu0 0.0
        %866 = vmatprep.subr.mxu0 0.0
        %867 = vmatpush1.msra.mxu0 0.0
        %868 = vmatprep.subr.mxu0 0.0
        %869 = vmatpush1.msra.mxu0 0.0
        %870 = vmatprep.subr.mxu0 0.0
        %871 = vmatpush1.msra.mxu0 0.0
        %872 = vmatprep.subr.mxu0 0.0
        %873 = vmatpush1.msra.mxu0 0.0
        %874 = vmatprep.subr.mxu0 0.0
        %875 = vmatpush1.msra.mxu0 0.0
        %876 = vmatprep.subr.mxu0 0.0
        %877 = vmatpush1.msra.mxu0 0.0
        %878 = vmatprep.subr.mxu0 0.0
        %879 = vmatpush1.msra.mxu0 0.0
        %880 = vmatprep.mubr.f32.mxu0 0.0
        %881 = vmatmul.mubr.f32.gmra.mrb[0].mxu0 %v814
        %v882 = vpop.f32.mrb[0].mxu0
        %v883 = vadd.f32 1e-05, %v882
        %v884 = vpop.f32.mrb[0].mxu0
        %885 = vdwg.mxu0
        %v886 = vrsqrt.pop %v883
        %v887 = vmul.f32 %v811, %v886
        %v888 = vld [vmem:[%s11] sm:$0x1]
        %v890 = vlaneseq
        %v891 = vshrl.u32 %v890, 7
        %v892 = vsub.s32 0, %v891
        %v893 = vrot.slane %v888, %v892
        %v895 = vmul.f32 %v887, %v893
        %v896 = vld [vmem:[%s12] sm:$0x1]
        %v898 = vlaneseq
        %v899 = vshrl.u32 %v898, 7
        %v900 = vsub.s32 0, %v899
        %v901 = vrot.slane %v896, %v900
        %v903 = vadd.f32 %v895, %v901
        %v905 = vrot.slane %v903, 7
        %vm907 = vcmask 1040384
        %v908 = vsel %vm907, 0.0, %v905
        %v909 = vrot.slane %v903, 1
        %vm911 = vcmask 1046528
        %v912 = vsel %vm911, %v909, 0.0
        %v913 = vpack.c.bf16 %v903, %v903
        %v914 = vpack.c.bf16 %v908, %v908
        %v915 = vpack.c.bf16 %v912, %v912
        %v916 = vld [vmem:[%s13] sm:$0xf]
        %v917 = vld [vmem:[%s13 + $0x4] sm:$0xf]
        %v918 = vld [vmem:[%s14] sm:$0x1]
        %v920 = vlaneseq
        %v921 = vshrl.u32 %v920, 7
        %v922 = vsub.s32 0, %v921
        %v923 = vrot.slane %v918, %v922
        %v927 = vunpack.c.l.b16 %v916
        %v928 = vunpack.c.l.b16 %v917
        %v929 = vpack.c.b16 %v928, %v927
        %v932 = vsel %vm692, %v913, 0
        %934 = vmatprep.subr.bf16.mxu0 0
        %935 = vmatpush1.bf16.msra.mxu0 %v929
        %936 = vmatprep.subr.bf16.mxu0 0
        %937 = vmatpush1.bf16.msra.mxu0 0
        %938 = vmatprep.subr.bf16.mxu0 0
        %939 = vmatpush1.bf16.msra.mxu0 0
        %940 = vmatprep.subr.bf16.mxu0 0
        %941 = vmatpush1.bf16.msra.mxu0 0
        %942 = vmatprep.subr.bf16.mxu0 0
        %943 = vmatpush1.bf16.msra.mxu0 0
        %944 = vmatprep.subr.bf16.mxu0 0
        %945 = vmatpush1.bf16.msra.mxu0 0
        %946 = vmatprep.subr.bf16.mxu0 0
        %947 = vmatpush1.bf16.msra.mxu0 0
        %948 = vmatprep.subr.bf16.mxu0 0
        %949 = vmatpush1.bf16.msra.mxu0 0
        %950 = vmatprep.subr.bf16.mxu0 0
        %951 = vmatpush1.bf16.msra.mxu0 0
        %952 = vmatprep.subr.bf16.mxu0 0
        %953 = vmatpush1.bf16.msra.mxu0 0
        %954 = vmatprep.subr.bf16.mxu0 0
        %955 = vmatpush1.bf16.msra.mxu0 0
        %956 = vmatprep.subr.bf16.mxu0 0
        %957 = vmatpush1.bf16.msra.mxu0 0
        %958 = vmatprep.subr.bf16.mxu0 0
        %959 = vmatpush1.bf16.msra.mxu0 0
        %960 = vmatprep.subr.bf16.mxu0 0
        %961 = vmatpush1.bf16.msra.mxu0 0
        %962 = vmatprep.subr.bf16.mxu0 0
        %963 = vmatpush1.bf16.msra.mxu0 0
        %964 = vmatprep.subr.bf16.mxu0 0
        %965 = vmatpush1.bf16.msra.mxu0 0
        %966 = vmatprep.mubr.bf16.mxu0 0
        %967 = vmatmul.mubr.bf16.gmra.mrb[0].mxu0 %v932
        %v968 = vpop.f32.mrb[0].mxu0
        %v969 = vadd.f32 %v923, %v968
        %v970 = vpop.f32.mrb[0].mxu0
        %v971 = vpop.f32.mrb[0].mxu0
        %v972 = vpop.f32.mrb[0].mxu0
        %973 = vdwg.mxu0
        %v974 = vld [vmem:[%s15] sm:$0xf]
        %v975 = vld [vmem:[%s15 + $0x4] sm:$0xf]
        %s976 = scalar_lea.vmem %s15, 8
        %v977 = vld [vmem:[%s976] sm:$0xf]
        %v978 = vld [vmem:[%s976 + $0x4] sm:$0xf]
        %v981 = vunpack.c.l.b16 %v977
        %v982 = vunpack.c.l.b16 %v978
        %v983 = vpack.c.b16 %v982, %v981
        %985 = vmatprep.subr.bf16.mxu0 0
        %986 = vmatpush1.bf16.msra.mxu0 %v983
        %987 = vmatprep.subr.bf16.mxu0 0
        %988 = vmatpush1.bf16.msra.mxu0 0
        %989 = vmatprep.subr.bf16.mxu0 0
        %990 = vmatpush1.bf16.msra.mxu0 0
        %991 = vmatprep.subr.bf16.mxu0 0
        %992 = vmatpush1.bf16.msra.mxu0 0
        %993 = vmatprep.subr.bf16.mxu0 0
        %994 = vmatpush1.bf16.msra.mxu0 0
        %995 = vmatprep.subr.bf16.mxu0 0
        %996 = vmatpush1.bf16.msra.mxu0 0
        %997 = vmatprep.subr.bf16.mxu0 0
        %998 = vmatpush1.bf16.msra.mxu0 0
        %999 = vmatprep.subr.bf16.mxu0 0
        %1000 = vmatpush1.bf16.msra.mxu0 0
        %1001 = vmatprep.subr.bf16.mxu0 0
        %1002 = vmatpush1.bf16.msra.mxu0 0
        %1003 = vmatprep.subr.bf16.mxu0 0
        %1004 = vmatpush1.bf16.msra.mxu0 0
        %1005 = vmatprep.subr.bf16.mxu0 0
        %1006 = vmatpush1.bf16.msra.mxu0 0
        %1007 = vmatprep.subr.bf16.mxu0 0
        %1008 = vmatpush1.bf16.msra.mxu0 0
        %1009 = vmatprep.subr.bf16.mxu0 0
        %1010 = vmatpush1.bf16.msra.mxu0 0
        %1011 = vmatprep.subr.bf16.mxu0 0
        %1012 = vmatpush1.bf16.msra.mxu0 0
        %1013 = vmatprep.subr.bf16.mxu0 0
        %1014 = vmatpush1.bf16.msra.mxu0 0
        %1015 = vmatprep.subr.bf16.mxu0 0
        %1016 = vmatpush1.bf16.msra.mxu0 0
        %1017 = vmatprep.mubr.bf16.mxu0 0
        %1018 = vmatmul.mubr.bf16.gmra.mrb[0].mxu0 %v932
        %v1019 = vpop.f32.mrb[0].mxu0
        %v1020 = vadd.f32 0.0, %v1019
        %v1021 = vpop.f32.mrb[0].mxu0
        %v1022 = vpop.f32.mrb[0].mxu0
        %v1023 = vpop.f32.mrb[0].mxu0
        %1024 = vdwg.mxu0
        %v1027 = vunpack.c.l.b16 %v974
        %v1028 = vunpack.c.l.b16 %v975
        %v1029 = vpack.c.b16 %v1028, %v1027
        %v1032 = vsel %vm692, %v914, 0
        %1034 = vmatprep.subr.bf16.mxu0 0
        %1035 = vmatpush1.bf16.msra.mxu0 %v1029
        %1036 = vmatprep.subr.bf16.mxu0 0
        %1037 = vmatpush1.bf16.msra.mxu0 0
        %1038 = vmatprep.subr.bf16.mxu0 0
        %1039 = vmatpush1.bf16.msra.mxu0 0
        %1040 = vmatprep.subr.bf16.mxu0 0
        %1041 = vmatpush1.bf16.msra.mxu0 0
        %1042 = vmatprep.subr.bf16.mxu0 0
        %1043 = vmatpush1.bf16.msra.mxu0 0
        %1044 = vmatprep.subr.bf16.mxu0 0
        %1045 = vmatpush1.bf16.msra.mxu0 0
        %1046 = vmatprep.subr.bf16.mxu0 0
        %1047 = vmatpush1.bf16.msra.mxu0 0
        %1048 = vmatprep.subr.bf16.mxu0 0
        %1049 = vmatpush1.bf16.msra.mxu0 0
        %1050 = vmatprep.subr.bf16.mxu0 0
        %1051 = vmatpush1.bf16.msra.mxu0 0
        %1052 = vmatprep.subr.bf16.mxu0 0
        %1053 = vmatpush1.bf16.msra.mxu0 0
        %1054 = vmatprep.subr.bf16.mxu0 0
        %1055 = vmatpush1.bf16.msra.mxu0 0
        %1056 = vmatprep.subr.bf16.mxu0 0
        %1057 = vmatpush1.bf16.msra.mxu0 0
        %1058 = vmatprep.subr.bf16.mxu0 0
        %1059 = vmatpush1.bf16.msra.mxu0 0
        %1060 = vmatprep.subr.bf16.mxu0 0
        %1061 = vmatpush1.bf16.msra.mxu0 0
        %1062 = vmatprep.subr.bf16.mxu0 0
        %1063 = vmatpush1.bf16.msra.mxu0 0
        %1064 = vmatprep.subr.bf16.mxu0 0
        %1065 = vmatpush1.bf16.msra.mxu0 0
        %1066 = vmatprep.mubr.bf16.mxu0 0
        %1067 = vmatmul.mubr.bf16.gmra.mrb[0].mxu0 %v1032
        %v1068 = vpop.f32.mrb[0].mxu0
        %v1069 = vadd.f32 %v1020, %v1068
        %v1070 = vpop.f32.mrb[0].mxu0
        %v1071 = vpop.f32.mrb[0].mxu0
        %v1072 = vpop.f32.mrb[0].mxu0
        %1073 = vdwg.mxu0
        %s1074 = scalar_lea.vmem %s15, 16
        %v1075 = vld [vmem:[%s1074] sm:$0xf]
        %v1076 = vld [vmem:[%s1074 + $0x4] sm:$0xf]
        %v1079 = vunpack.c.l.b16 %v1075
        %v1080 = vunpack.c.l.b16 %v1076
        %v1081 = vpack.c.b16 %v1080, %v1079
        %v1084 = vsel %vm692, %v915, 0
        %1086 = vmatprep.subr.bf16.mxu0 0
        %1087 = vmatpush1.bf16.msra.mxu0 %v1081
        %1088 = vmatprep.subr.bf16.mxu0 0
        %1089 = vmatpush1.bf16.msra.mxu0 0
        %1090 = vmatprep.subr.bf16.mxu0 0
        %1091 = vmatpush1.bf16.msra.mxu0 0
        %1092 = vmatprep.subr.bf16.mxu0 0
        %1093 = vmatpush1.bf16.msra.mxu0 0
        %1094 = vmatprep.subr.bf16.mxu0 0
        %1095 = vmatpush1.bf16.msra.mxu0 0
        %1096 = vmatprep.subr.bf16.mxu0 0
        %1097 = vmatpush1.bf16.msra.mxu0 0
        %1098 = vmatprep.subr.bf16.mxu0 0
        %1099 = vmatpush1.bf16.msra.mxu0 0
        %1100 = vmatprep.subr.bf16.mxu0 0
        %1101 = vmatpush1.bf16.msra.mxu0 0
        %1102 = vmatprep.subr.bf16.mxu0 0
        %1103 = vmatpush1.bf16.msra.mxu0 0
        %1104 = vmatprep.subr.bf16.mxu0 0
        %1105 = vmatpush1.bf16.msra.mxu0 0
        %1106 = vmatprep.subr.bf16.mxu0 0
        %1107 = vmatpush1.bf16.msra.mxu0 0
        %1108 = vmatprep.subr.bf16.mxu0 0
        %1109 = vmatpush1.bf16.msra.mxu0 0
        %1110 = vmatprep.subr.bf16.mxu0 0
        %1111 = vmatpush1.bf16.msra.mxu0 0
        %1112 = vmatprep.subr.bf16.mxu0 0
        %1113 = vmatpush1.bf16.msra.mxu0 0
        %1114 = vmatprep.subr.bf16.mxu0 0
        %1115 = vmatpush1.bf16.msra.mxu0 0
        %1116 = vmatprep.subr.bf16.mxu0 0
        %1117 = vmatpush1.bf16.msra.mxu0 0
        %1118 = vmatprep.mubr.bf16.mxu0 0
        %1119 = vmatmul.mubr.bf16.gmra.mrb[0].mxu0 %v1084
        %v1120 = vpop.f32.mrb[0].mxu0
        %v1121 = vadd.f32 0.0, %v1120
        %v1122 = vpop.f32.mrb[0].mxu0
        %v1123 = vpop.f32.mrb[0].mxu0
        %v1124 = vpop.f32.mrb[0].mxu0
        %1125 = vdwg.mxu0
        %v1126 = vadd.f32 %v1069, %v1121
        %v1127 = vld [vmem:[%s16] sm:$0x1]
        %v1129 = vlaneseq
        %v1130 = vshrl.u32 %v1129, 7
        %v1131 = vsub.s32 0, %v1130
        %v1132 = vrot.slane %v1127, %v1131
        %v1134 = vadd.f32 %v1126, %v1132
        %v1135 = vmul.f32 %v969, 0.5
        %v1136 = vmul.f32 %v969, 0.044715
        %v1137 = vmul.f32 %v1136, %v969
        %v1138 = vmul.f32 %v1137, %v969
        %v1139 = vadd.f32 %v969, %v1138
        %v1140 = vmul.f32 %v1139, 0.7978846
        %v1141 = vtanh.pop %v1140
        %v1142 = vadd.f32 %v1141, 1.0
        %v1143 = vmul.f32 %v1135, %v1142
        %v1144 = vmul.f32 %v1134, 0.5
        %v1145 = vmul.f32 %v1134, 0.044715
        %v1146 = vmul.f32 %v1145, %v1134
        %v1147 = vmul.f32 %v1146, %v1134
        %v1148 = vadd.f32 %v1134, %v1147
        %v1149 = vmul.f32 %v1148, 0.7978846
        %v1150 = vtanh.pop %v1149
        %v1151 = vadd.f32 %v1150, 1.0
        %v1152 = vmul.f32 %v1144, %v1151
        %v1153 = vmul.f32 %v969, %v1152
        %v1154 = vmul.f32 %v1134, %v1143
        %v1155 = vadd.f32 %v1153, %v1154
        %v1156 = vpack.c.bf16 %v1155, %v1155
        %v1157 = vld [vmem:[%s17] sm:$0xf]
        %v1158 = vld [vmem:[%s17 + $0x4] sm:$0xf]
        %v1159 = vld [vmem:[%s17 + $0x8] sm:$0xf]
        %v1160 = vld [vmem:[%s17 + $0xc] sm:$0xf]
        %v1161 = vld [vmem:[%s17 + $0x10] sm:$0xf]
        %v1162 = vld [vmem:[%s17 + $0x14] sm:$0xf]
        %v1163 = vld [vmem:[%s18] sm:$0x1]
        %v1165 = vlaneseq
        %v1166 = vshrl.u32 %v1165, 7
        %v1167 = vsub.s32 0, %v1166
        %v1168 = vrot.slane %v1163, %v1167
        %v1176 = vunpack.c.l.b16 %v1157
        %v1177 = vunpack.c.l.b16 %v1158
        %v1178 = vunpack.c.l.b16 %v1159
        %v1179 = vunpack.c.l.b16 %v1160
        %v1180 = vunpack.c.l.b16 %v1161
        %v1181 = vunpack.c.l.b16 %v1162
        %v1182 = vpack.c.b16 %v1177, %v1176
        %v1183 = vpack.c.b16 %v1179, %v1178
        %v1184 = vpack.c.b16 %v1181, %v1180
        %vm1188 = vcmask 392192
        %v1190 = vsel %vm1188, %v1156, 0
        %1192 = vmatprep.subr.bf16.mxu0 0
        %1193 = vmatpush1.bf16.msra.mxu0 %v1182
        %1194 = vmatprep.subr.bf16.mxu0 0
        %1195 = vmatpush1.bf16.msra.mxu0 %v1183
        %1196 = vmatprep.subr.bf16.mxu0 0
        %1197 = vmatpush1.bf16.msra.mxu0 %v1184
        %1198 = vmatprep.subr.bf16.mxu0 0
        %1199 = vmatpush1.bf16.msra.mxu0 0
        %1200 = vmatprep.subr.bf16.mxu0 0
        %1201 = vmatpush1.bf16.msra.mxu0 0
        %1202 = vmatprep.subr.bf16.mxu0 0
        %1203 = vmatpush1.bf16.msra.mxu0 0
        %1204 = vmatprep.subr.bf16.mxu0 0
        %1205 = vmatpush1.bf16.msra.mxu0 0
        %1206 = vmatprep.subr.bf16.mxu0 0
        %1207 = vmatpush1.bf16.msra.mxu0 0
        %1208 = vmatprep.subr.bf16.mxu0 0
        %1209 = vmatpush1.bf16.msra.mxu0 0
        %1210 = vmatprep.subr.bf16.mxu0 0
        %1211 = vmatpush1.bf16.msra.mxu0 0
        %1212 = vmatprep.subr.bf16.mxu0 0
        %1213 = vmatpush1.bf16.msra.mxu0 0
        %1214 = vmatprep.subr.bf16.mxu0 0
        %1215 = vmatpush1.bf16.msra.mxu0 0
        %1216 = vmatprep.subr.bf16.mxu0 0
        %1217 = vmatpush1.bf16.msra.mxu0 0
        %1218 = vmatprep.subr.bf16.mxu0 0
        %1219 = vmatpush1.bf16.msra.mxu0 0
        %1220 = vmatprep.subr.bf16.mxu0 0
        %1221 = vmatpush1.bf16.msra.mxu0 0
        %1222 = vmatprep.subr.bf16.mxu0 0
        %1223 = vmatpush1.bf16.msra.mxu0 0
        %1224 = vmatprep.mubr.bf16.mxu0 0
        %1225 = vmatmul.mubr.bf16.gmra.mrb[0].mxu0 %v1190
        %v1226 = vpop.f32.mrb[0].mxu0
        %v1227 = vadd.f32 %v1168, %v1226
        %v1228 = vpop.f32.mrb[0].mxu0
        %v1229 = vpop.f32.mrb[0].mxu0
        %v1230 = vpop.f32.mrb[0].mxu0
        %1231 = vdwg.mxu0
        %v1232 = vld [vmem:[%s626] sm:$0xff]
        %v1233 = vadd.f32 %v1232, %v1227
        %1234 = vst.msk [vmem:[%s622] sm:$0xff] %vm692, %v1233
        %s1235 = sand.u32 %s456, 1
        %s1236 = scalar_lea.sflag [#allocation4], %s1235
        %s1237 = sand.u32 %s456, 1
        %s1238 = smul.addr %s1237, 8
        %s1239 = scalar_lea.vmem [#allocation3], %s1238
        // Predicated region
        $region97: #{tslanet_layer.3} parent=95 // pred_check
          %p1240 = pneg %p466
        $region98: #{tslanet_layer.3} parent=95 // pred_check_branch
          %1242 = sbr.rel (%p1240) target = $region100
        $region99: #{tslanet_layer.3} parent=95 // pred_region
          %s1244 = ssub.s32 128, 128
          %1245 = vsyncadd %s1236, %s1244
          %s1246 = smul.addr %s34, 128
          %s1247 = scalar_lea.hbm %s19, %s1246
          %s1249 = sshll.u32 %s1239, 4
          %s1250 = int_to_ptr.vmem [resolvable:$true] %s1249
          %1252 = dma.vmem_to_hbm [thread:$0]  %s1250, 128, %s1247, %s1236
        $region100: #{tslanet_layer.3} parent=95 // pred_fallthru
          _
      $region96: #{tslanet_layer.3} parent=5 // pred_fallthru
        _
      %p1253 = scmp.le.s32.totalorder 2, %s29
      // Predicated region
      $region101: #{tslanet_layer.3} parent=5 // pred_check
        %p1254 = pneg %p1253
      $region102: #{tslanet_layer.3} parent=5 // pred_check_branch
        %1256 = sbr.rel (%p1254) target = $region104
      $region103: #{tslanet_layer.3} parent=5 // pred_region
        %s1257 = ssub.s32 %s29, 2
        // Predicated region
        $region105: #{tslanet_layer.3} parent=103 // pred_check
          %p1258 = pneg %p472
        $region106: #{tslanet_layer.3} parent=103 // pred_check_branch
          %1260 = sbr.rel (%p1258) target = $region108
        $region107: #{tslanet_layer.3} parent=103 // pred_region
          %s1261 = sand.u32 %s457, 1
          %s1262 = scalar_lea.sflag [#allocation4], %s1261
          %s1263 = sand.u32 %s457, 1
          %s1264 = smul.addr %s1263, 8
          %s1265 = scalar_lea.vmem [#allocation3], %s1264
          %1266 = dma.done %s1262, 128
        $region108: #{tslanet_layer.3} parent=103 // pred_fallthru
          _
      $region104: #{tslanet_layer.3} parent=5 // pred_fallthru
        _
    $region6: #{tslanet_layer.3} parent=1 // loop_footer
      %s33 = sadd.s32 1, %s29
    $region7: #{tslanet_layer.3} parent=1 // loop_footer_branch
      %28 = sbr.rel target = $region3
    $region8: #{tslanet_layer.3} parent=1 // loop_exit
      _
    %1267 = vsyncpa [#allocation4], 1
    %s1268 = scalar_lea.sflag [#allocation4], 1
    %1269 = vsyncpa %s1268, 1

</llo_original>
